<compile_context>
chip_gen: v7x
topology: tpu7x:2x2x1
jax: 0.10.0
libtpu: 0.0.40
codegen_flags: <defaults>
</compile_context>

<pallas_src>
import functools
import math

import jax
import jax.numpy as jnp
from jax import lax
from jax.experimental import pallas as pl
from jax.experimental.pallas import tpu as pltpu


def _ds_attention_kernel(q_ref, k_ref, v_ref, delta_ref, tau_ref,
                         o_ref, m_ref, l_ref, acc_ref,
                         *, n_heads, d_qk, d_v, block_q, block_k):
    """One (batch, q-tile, k-tile) step of flash-style DSAttention.

    q_ref: (block_q, H*d_qk), k_ref: (block_k, H*d_qk), v_ref: (block_k, H*d_v)
    delta_ref: (1, block_k)  (already multiplied by the softmax scale)
    tau_ref:   (B,) in SMEM  (already multiplied by the softmax scale)
    o_ref:     (block_q, H*d_v)  lane-dense output slab
    scratch: m_ref/l_ref (H, block_q, 1) f32, acc_ref (H, block_q, d_v) f32
    """
    b = pl.program_id(0)
    qt = pl.program_id(1)
    kt = pl.program_id(2)
    n_kt = pl.num_programs(2)

    @pl.when(kt == 0)
    def _init():
        m_ref[...] = jnp.full(m_ref.shape, -jnp.inf, m_ref.dtype)
        l_ref[...] = jnp.zeros(l_ref.shape, l_ref.dtype)
        acc_ref[...] = jnp.zeros(acc_ref.shape, acc_ref.dtype)

    # Causal attention: tiles strictly above the diagonal contribute nothing.
    @pl.when(kt * block_k <= qt * block_q + (block_q - 1))
    def _compute():
        tau = tau_ref[b]                 # scalar (scale already folded in)
        delta = delta_ref[...]           # (1, block_k), scale already folded in

        # Global row/col indices so the causal mask stays correct under tiling.
        row = qt * block_q + lax.broadcasted_iota(
            jnp.int32, (block_q, block_k), 0)
        col = kt * block_k + lax.broadcasted_iota(
            jnp.int32, (block_q, block_k), 1)
        allowed = col <= row
        neg = jnp.float32(-1e30)         # large finite negative (bf16-safe)

        for h in range(n_heads):
            q_h = q_ref[:, h * d_qk:(h + 1) * d_qk]   # (bq, E), input dtype
            k_h = k_ref[:, h * d_qk:(h + 1) * d_qk]   # (bk, E), input dtype
            v_h = v_ref[:, h * d_v:(h + 1) * d_v]     # (bk, D), input dtype

            # scores = (Q K^T) * (tau*scale) + delta*scale ; f32 accumulate.
            s = lax.dot_general(q_h, k_h, (((1,), (1,)), ((), ())),
                                preferred_element_type=jnp.float32)
            s = s * tau + delta
            s = jnp.where(allowed, s, neg)

            # Online softmax update for this head.
            m_prev = m_ref[h]                                   # (bq, 1)
            m_new = jnp.maximum(m_prev, jnp.max(s, axis=-1, keepdims=True))
            alpha = jnp.exp(m_prev - m_new)
            p = jnp.exp(s - m_new)                              # (bq, bk) f32
            l_ref[h] = alpha * l_ref[h] + jnp.sum(p, axis=-1, keepdims=True)
            acc_ref[h] = alpha * acc_ref[h] + jnp.dot(
                p.astype(v_h.dtype), v_h, preferred_element_type=jnp.float32)
            m_ref[h] = m_new

    @pl.when(kt == n_kt - 1)
    def _finalize():
        # Normalize the (bq, D) accumulators (EUP reciprocal) and assemble a
        # single lane-dense (bq, H*D) store.
        outs = []
        for h in range(n_heads):
            inv_l = pl.reciprocal(l_ref[h], approx=True)        # (bq, 1)
            outs.append((acc_ref[h] * inv_l).astype(o_ref.dtype))
        o_ref[...] = jnp.concatenate(outs, axis=-1)


def _pick_block(n, candidates=(256, 128)):
    for c in candidates:
        if n >= c and n % c == 0:
            return c
    return n


def ds_attention(queries, keys, values, tau, delta, *, block_q=None, block_k=None):
    """Pallas DSAttention forward. Returns V with shape [B, L, H, D]."""
    B, L, H, E = queries.shape
    _, S, _, D = values.shape
    if L != S:
        raise ValueError("Causal (triangular-mask) DSAttention requires S == L.")

    scale = 1.0 / math.sqrt(E)

    # Layout-preserving views only (no HBM transposes): heads stay interleaved
    # on the minor axis so every block is lane-dense.
    q3 = queries.reshape(B, L, H * E)
    k3 = keys.reshape(B, S, H * E)
    v3 = values.reshape(B, S, H * D)
    delta3 = (delta * scale).reshape(B, 1, S).astype(jnp.float32)
    tau1 = (tau * scale).reshape(B).astype(jnp.float32)   # per-batch scalar, SMEM

    bq = block_q or _pick_block(L)
    bk = block_k or _pick_block(S)
    assert L % bq == 0 and S % bk == 0, (L, S, bq, bk)
    grid = (B, L // bq, S // bk)

    kernel = functools.partial(
        _ds_attention_kernel, n_heads=H, d_qk=E, d_v=D, block_q=bq, block_k=bk)

    itemsize = jnp.dtype(queries.dtype).itemsize
    cost = pl.CostEstimate(
        flops=2 * B * H * L * S * (E + D),
        transcendentals=B * H * L * S,
        bytes_accessed=((q3.size + k3.size + v3.size + B * L * H * D) * itemsize
                        + delta3.size * 4 + tau1.size * 4),
    )

    out = pl.pallas_call(
        kernel,
        out_shape=jax.ShapeDtypeStruct((B, L, H * D), queries.dtype),
        grid_spec=pltpu.PrefetchScalarGridSpec(
            num_scalar_prefetch=0,
            grid=grid,
            in_specs=[
                pl.BlockSpec((None, bq, H * E), lambda b, qt, kt: (b, qt, 0)),
                pl.BlockSpec((None, bk, H * E), lambda b, qt, kt: (b, kt, 0)),
                pl.BlockSpec((None, bk, H * D), lambda b, qt, kt: (b, kt, 0)),
                pl.BlockSpec((None, 1, bk), lambda b, qt, kt: (b, 0, kt)),
                pl.BlockSpec(memory_space=pltpu.MemorySpace.SMEM),
            ],
            out_specs=pl.BlockSpec((None, bq, H * D), lambda b, qt, kt: (b, qt, 0)),
            scratch_shapes=[
                pltpu.VMEM((H, bq, 1), jnp.float32),    # running max m
                pltpu.VMEM((H, bq, 1), jnp.float32),    # running denom l
                pltpu.VMEM((H, bq, D), jnp.float32),    # output accumulator
            ]),
        compiler_params=pltpu.CompilerParams(
            dimension_semantics=("parallel", "parallel", "arbitrary"),
            vmem_limit_bytes=32 * 1024 * 1024),
        cost_estimate=cost,
    )(q3, k3, v3, delta3, tau1)

    return out.reshape(B, L, H, D)


def ds_attention_ref(queries, keys, values, tau, delta):
    """Pure-JAX reference mirroring the PyTorch DSAttention forward (eval mode)."""
    B, L, H, E = queries.shape
    _, S, _, D = values.shape
    scale = 1.0 / math.sqrt(E)
    scores = jnp.einsum('blhe,bshe->bhls', queries, keys)
    scores = scores * tau.reshape(B, 1, 1, 1) + delta.reshape(B, 1, 1, S)
    mask = jnp.triu(jnp.ones((L, S), dtype=bool), k=1)
    scores = jnp.where(mask[None, None], -jnp.inf, scores)
    A = jax.nn.softmax(scale * scores, axis=-1)
    return jnp.einsum('bhls,bshd->blhd', A, values)


if __name__ == "__main__":
    run = jax.jit(ds_attention)

    # Two configs: a tiny one (single tile) and one that exercises multi-tile
    # flash accumulation + cross-tile causal masking (grid (2, 2, 2)).
    configs = [
        dict(B=2, L=8, H=4, E=32, D=32),
        dict(B=2, L=256, H=4, E=32, D=32),
    ]

    for cfg in configs:
        B, L, H, E, D = cfg["B"], cfg["L"], cfg["H"], cfg["E"], cfg["D"]
        S = L  # causal mask requires S == L

        key = jax.random.PRNGKey(0)
        kq, kk, kv, ktau, kdel = jax.random.split(key, 5)
        queries = jax.random.normal(kq, (B, L, H, E), dtype=jnp.float32)
        keys = jax.random.normal(kk, (B, S, H, E), dtype=jnp.float32)
        values = jax.random.normal(kv, (B, S, H, D), dtype=jnp.float32)
        tau = jnp.exp(jax.random.normal(ktau, (B,), dtype=jnp.float32) * 0.1)
        delta = jax.random.normal(kdel, (B, S), dtype=jnp.float32) * 0.1

        out = jax.block_until_ready(run(queries, keys, values, tau, delta))
        ref = ds_attention_ref(queries, keys, values, tau, delta)

        assert out.shape == (B, L, H, D), out.shape
        err = float(jnp.max(jnp.abs(out - ref)))
        # Loose-ish tolerance: pl.reciprocal(approx=True) is an approximate
        # EUP reciprocal; structural bugs (mask/softmax/scale) give O(0.1+) errors.
        assert err < 2e-2, f"max abs err {err} at cfg {cfg}"

    print("KERNEL_OK")
</pallas_src>

<mosaic_0001>
module attributes {stable_mosaic.version = 11 : i64} {
  func.func @_ds_attention_kernel(%arg0: i32, %arg1: i32, %arg2: i32, %arg3: memref<1x8x128xf32, #tpu.memory_space<vmem>>, %arg4: memref<1x8x128xf32, #tpu.memory_space<vmem>>, %arg5: memref<1x8x128xf32, #tpu.memory_space<vmem>>, %arg6: memref<1x1x8xf32, #tpu.memory_space<vmem>>, %arg7: memref<2xf32, #tpu.memory_space<smem>>, %arg8: memref<1x8x128xf32, #tpu.memory_space<vmem>>, %arg9: memref<4x8x1xf32, #tpu.memory_space<vmem>>, %arg10: memref<4x8x1xf32, #tpu.memory_space<vmem>>, %arg11: memref<4x8x32xf32, #tpu.memory_space<vmem>>) attributes {dimension_semantics = [#tpu.dimension_semantics<parallel>, #tpu.dimension_semantics<parallel>, #tpu.dimension_semantics<arbitrary>], iteration_bounds = array<i64: 2, 1, 1>, scalar_prefetch = 0 : i64, scratch_operands = 3 : i64, tpu.core_type = #tpu.core_type<tc>, window_params = [{transform_indices = @transform_0, window_bounds = array<i64: 1, 8, 128>}, {transform_indices = @transform_1, window_bounds = array<i64: 1, 8, 128>}, {transform_indices = @transform_2, window_bounds = array<i64: 1, 8, 128>}, {transform_indices = @transform_3, window_bounds = array<i64: 1, 1, 8>}, {transform_indices = @transform_4, window_bounds = array<i64: 2>}, {transform_indices = @transform_5, window_bounds = array<i64: 1, 8, 128>}]} {
    %c0_i32 = arith.constant 0 : i32
    %0 = arith.cmpi eq, %arg2, %c0_i32 : i32
    %1 = arith.extui %0 : i1 to i32
    %c0_i32_0 = arith.constant 0 : i32
    %2 = arith.cmpi ne, %1, %c0_i32_0 : i32
    scf.if %2 {
      %cst = arith.constant 0xFF800000 : f32
      %12 = vector.broadcast %cst : f32 to vector<4x8x1xf32>
      %c0 = arith.constant 0 : index
      %c0_5 = arith.constant 0 : index
      %c0_6 = arith.constant 0 : index
      %13 = vector.load %arg9[%c0, %c0_5, %c0_6] : memref<4x8x1xf32, #tpu.memory_space<vmem>>, vector<4x8x1xf32>
      tpu.vector_store %arg9[%c0, %c0_5, %c0_6], %12 {strides = array<i32>} : memref<4x8x1xf32, #tpu.memory_space<vmem>>, vector<4x8x1xf32>,
      %cst_7 = arith.constant 0.000000e+00 : f32
      %14 = vector.broadcast %cst_7 : f32 to vector<4x8x1xf32>
      %c0_8 = arith.constant 0 : index
      %c0_9 = arith.constant 0 : index
      %c0_10 = arith.constant 0 : index
      %15 = vector.load %arg10[%c0_8, %c0_9, %c0_10] : memref<4x8x1xf32, #tpu.memory_space<vmem>>, vector<4x8x1xf32>
      tpu.vector_store %arg10[%c0_8, %c0_9, %c0_10], %14 {strides = array<i32>} : memref<4x8x1xf32, #tpu.memory_space<vmem>>, vector<4x8x1xf32>,
      %cst_11 = arith.constant 0.000000e+00 : f32
      %16 = vector.broadcast %cst_11 : f32 to vector<4x8x32xf32>
      %c0_12 = arith.constant 0 : index
      %c0_13 = arith.constant 0 : index
      %c0_14 = arith.constant 0 : index
      %17 = vector.load %arg11[%c0_12, %c0_13, %c0_14] : memref<4x8x32xf32, #tpu.memory_space<vmem>>, vector<4x8x32xf32>
      tpu.vector_store %arg11[%c0_12, %c0_13, %c0_14], %16 {strides = array<i32>} : memref<4x8x32xf32, #tpu.memory_space<vmem>>, vector<4x8x32xf32>,
    } else {
    }
    %c8_i32 = arith.constant 8 : i32
    %3 = arith.muli %arg2, %c8_i32 : i32
    %c8_i32_1 = arith.constant 8 : i32
    %4 = arith.muli %arg1, %c8_i32_1 : i32
    %c7_i32 = arith.constant 7 : i32
    %5 = arith.addi %4, %c7_i32 : i32
    %6 = arith.cmpi sle, %3, %5 : i32
    %7 = arith.extui %6 : i1 to i32
    %c0_i32_2 = arith.constant 0 : i32
    %8 = arith.cmpi ne, %7, %c0_i32_2 : i32
    scf.if %8 {
      %12 = arith.index_cast %arg0 : i32 to index
      %13 = memref.load %arg7[%12] : memref<2xf32, #tpu.memory_space<smem>>
      %c0 = arith.constant 0 : index
      %c0_5 = arith.constant 0 : index
      %c0_6 = arith.constant 0 : index
      %14 = vector.load %arg6[%c0, %c0_5, %c0_6] : memref<1x1x8xf32, #tpu.memory_space<vmem>>, vector<1x1x8xf32>
      %15 = vector.shape_cast %14 : vector<1x1x8xf32> to vector<1x8xf32>
      %c8_i32_7 = arith.constant 8 : i32
      %16 = arith.muli %arg1, %c8_i32_7 : i32
      %17 = tpu.iota {dimensions = array<i32: 0>} : vector<8x8xi32>
      %18 = vector.broadcast %16 : i32 to vector<8x8xi32>
      %19 = arith.addi %18, %17 : vector<8x8xi32>
      %c8_i32_8 = arith.constant 8 : i32
      %20 = arith.muli %arg2, %c8_i32_8 : i32
      %21 = tpu.iota {dimensions = array<i32: 1>} : vector<8x8xi32>
      %22 = vector.broadcast %20 : i32 to vector<8x8xi32>
      %23 = arith.addi %22, %21 : vector<8x8xi32>
      %24 = arith.cmpi sle, %23, %19 : vector<8x8xi32>
      %c0_9 = arith.constant 0 : index
      %c0_10 = arith.constant 0 : index
      %c0_11 = arith.constant 0 : index
      %25 = vector.load %arg3[%c0_9, %c0_10, %c0_11] : memref<1x8x128xf32, #tpu.memory_space<vmem>>, vector<1x8x32xf32>
      %26 = vector.shape_cast %25 : vector<1x8x32xf32> to vector<8x32xf32>
      %c0_12 = arith.constant 0 : index
      %c0_13 = arith.constant 0 : index
      %c0_14 = arith.constant 0 : index
      %27 = vector.load %arg4[%c0_12, %c0_13, %c0_14] : memref<1x8x128xf32, #tpu.memory_space<vmem>>, vector<1x8x32xf32>
      %28 = vector.shape_cast %27 : vector<1x8x32xf32> to vector<8x32xf32>
      %c0_15 = arith.constant 0 : index
      %c0_16 = arith.constant 0 : index
      %c0_17 = arith.constant 0 : index
      %29 = vector.load %arg5[%c0_15, %c0_16, %c0_17] : memref<1x8x128xf32, #tpu.memory_space<vmem>>, vector<1x8x32xf32>
      %30 = vector.shape_cast %29 : vector<1x8x32xf32> to vector<8x32xf32>
      %cst = arith.constant dense<0.000000e+00> : vector<8x8xf32>
      %31 = tpu.matmul %26, %28, %cst {dimension_numbers = #tpu.dot_dimension_numbers<[1], [1], [0], [0], [0, 0, 1, 0], [], []>} : vector<8x32xf32>, vector<8x32xf32>, vector<8x8xf32> -> vector<8x8xf32>
      %32 = vector.broadcast %13 : f32 to vector<8x8xf32>
      %33 = arith.mulf %31, %32 : vector<8x8xf32>
      %34 = vector.broadcast %15 : vector<1x8xf32> to vector<8x8xf32>
      %35 = arith.addf %33, %34 : vector<8x8xf32>
      %cst_18 = arith.constant -1.000000e+30 : f32
      %36 = vector.broadcast %cst_18 : f32 to vector<8x8xf32>
      %37 = arith.select %24, %35, %36 : vector<8x8xi1>, vector<8x8xf32>
      %c0_19 = arith.constant 0 : index
      %c0_20 = arith.constant 0 : index
      %c0_21 = arith.constant 0 : index
      %38 = vector.load %arg9[%c0_19, %c0_20, %c0_21] : memref<4x8x1xf32, #tpu.memory_space<vmem>>, vector<1x8x1xf32>
      %39 = vector.shape_cast %38 : vector<1x8x1xf32> to vector<8x1xf32>
      %cst_22 = arith.constant dense<0xFF800000> : vector<8xf32>
      %40 = vector.multi_reduction <maximumf>, %37, %cst_22 [1] : vector<8x8xf32> to vector<8xf32>
      %41 = vector.shape_cast %40 : vector<8xf32> to vector<8x1xf32>
      %42 = arith.maximumf %39, %41 : vector<8x1xf32>
      %43 = arith.subf %39, %42 : vector<8x1xf32>
      %44 = math.exp %43 : vector<8x1xf32>
      %45 = vector.broadcast %42 : vector<8x1xf32> to vector<8x8xf32>
      %46 = arith.subf %37, %45 : vector<8x8xf32>
      %47 = math.exp %46 : vector<8x8xf32>
      %c0_23 = arith.constant 0 : index
      %c0_24 = arith.constant 0 : index
      %c0_25 = arith.constant 0 : index
      %48 = vector.load %arg10[%c0_23, %c0_24, %c0_25] : memref<4x8x1xf32, #tpu.memory_space<vmem>>, vector<1x8x1xf32>
      %49 = vector.shape_cast %48 : vector<1x8x1xf32> to vector<8x1xf32>
      %50 = arith.mulf %44, %49 : vector<8x1xf32>
      %cst_26 = arith.constant dense<0.000000e+00> : vector<8xf32>
      %51 = vector.multi_reduction <add>, %47, %cst_26 [1] : vector<8x8xf32> to vector<8xf32>
      %52 = vector.shape_cast %51 : vector<8xf32> to vector<8x1xf32>
      %53 = arith.addf %50, %52 : vector<8x1xf32>
      %c0_27 = arith.constant 0 : index
      %c0_28 = arith.constant 0 : index
      %c0_29 = arith.constant 0 : index
      %54 = vector.load %arg10[%c0_27, %c0_28, %c0_29] : memref<4x8x1xf32, #tpu.memory_space<vmem>>, vector<1x8x1xf32>
      %55 = vector.shape_cast %54 : vector<1x8x1xf32> to vector<8x1xf32>
      %56 = vector.shape_cast %53 : vector<8x1xf32> to vector<1x8x1xf32>
      tpu.vector_store %arg10[%c0_27, %c0_28, %c0_29], %56 {strides = array<i32>} : memref<4x8x1xf32, #tpu.memory_space<vmem>>, vector<1x8x1xf32>,
      %c0_30 = arith.constant 0 : index
      %c0_31 = arith.constant 0 : index
      %c0_32 = arith.constant 0 : index
      %57 = vector.load %arg11[%c0_30, %c0_31, %c0_32] : memref<4x8x32xf32, #tpu.memory_space<vmem>>, vector<1x8x32xf32>
      %58 = vector.shape_cast %57 : vector<1x8x32xf32> to vector<8x32xf32>
      %59 = vector.broadcast %44 : vector<8x1xf32> to vector<8x32xf32>
      %60 = arith.mulf %59, %58 : vector<8x32xf32>
      %cst_33 = arith.constant dense<0.000000e+00> : vector<8x32xf32>
      %61 = tpu.matmul %47, %30, %cst_33 {dimension_numbers = #tpu.dot_dimension_numbers<[1], [0], [0], [1], [0, 0, 1, 1], [], []>} : vector<8x8xf32>, vector<8x32xf32>, vector<8x32xf32> -> vector<8x32xf32>
      %62 = arith.addf %60, %61 : vector<8x32xf32>
      %c0_34 = arith.constant 0 : index
      %c0_35 = arith.constant 0 : index
      %c0_36 = arith.constant 0 : index
      %63 = vector.load %arg11[%c0_34, %c0_35, %c0_36] : memref<4x8x32xf32, #tpu.memory_space<vmem>>, vector<1x8x32xf32>
      %64 = vector.shape_cast %63 : vector<1x8x32xf32> to vector<8x32xf32>
      %65 = vector.shape_cast %62 : vector<8x32xf32> to vector<1x8x32xf32>
      tpu.vector_store %arg11[%c0_34, %c0_35, %c0_36], %65 {strides = array<i32>} : memref<4x8x32xf32, #tpu.memory_space<vmem>>, vector<1x8x32xf32>,
      %c0_37 = arith.constant 0 : index
      %c0_38 = arith.constant 0 : index
      %c0_39 = arith.constant 0 : index
      %66 = vector.load %arg9[%c0_37, %c0_38, %c0_39] : memref<4x8x1xf32, #tpu.memory_space<vmem>>, vector<1x8x1xf32>
      %67 = vector.shape_cast %66 : vector<1x8x1xf32> to vector<8x1xf32>
      %68 = vector.shape_cast %42 : vector<8x1xf32> to vector<1x8x1xf32>
      tpu.vector_store %arg9[%c0_37, %c0_38, %c0_39], %68 {strides = array<i32>} : memref<4x8x1xf32, #tpu.memory_space<vmem>>, vector<1x8x1xf32>,
      %c0_40 = arith.constant 0 : index
      %c0_41 = arith.constant 0 : index
      %c32 = arith.constant 32 : index
      %69 = vector.load %arg3[%c0_40, %c0_41, %c32] : memref<1x8x128xf32, #tpu.memory_space<vmem>>, vector<1x8x32xf32>
      %70 = vector.shape_cast %69 : vector<1x8x32xf32> to vector<8x32xf32>
      %c0_42 = arith.constant 0 : index
      %c0_43 = arith.constant 0 : index
      %c32_44 = arith.constant 32 : index
      %71 = vector.load %arg4[%c0_42, %c0_43, %c32_44] : memref<1x8x128xf32, #tpu.memory_space<vmem>>, vector<1x8x32xf32>
      %72 = vector.shape_cast %71 : vector<1x8x32xf32> to vector<8x32xf32>
      %c0_45 = arith.constant 0 : index
      %c0_46 = arith.constant 0 : index
      %c32_47 = arith.constant 32 : index
      %73 = vector.load %arg5[%c0_45, %c0_46, %c32_47] : memref<1x8x128xf32, #tpu.memory_space<vmem>>, vector<1x8x32xf32>
      %74 = vector.shape_cast %73 : vector<1x8x32xf32> to vector<8x32xf32>
      %cst_48 = arith.constant dense<0.000000e+00> : vector<8x8xf32>
      %75 = tpu.matmul %70, %72, %cst_48 {dimension_numbers = #tpu.dot_dimension_numbers<[1], [1], [0], [0], [0, 0, 1, 0], [], []>} : vector<8x32xf32>, vector<8x32xf32>, vector<8x8xf32> -> vector<8x8xf32>
      %76 = vector.broadcast %13 : f32 to vector<8x8xf32>
      %77 = arith.mulf %75, %76 : vector<8x8xf32>
      %78 = vector.broadcast %15 : vector<1x8xf32> to vector<8x8xf32>
      %79 = arith.addf %77, %78 : vector<8x8xf32>
      %cst_49 = arith.constant -1.000000e+30 : f32
      %80 = vector.broadcast %cst_49 : f32 to vector<8x8xf32>
      %81 = arith.select %24, %79, %80 : vector<8x8xi1>, vector<8x8xf32>
      %c1 = arith.constant 1 : index
      %c0_50 = arith.constant 0 : index
      %c0_51 = arith.constant 0 : index
      %82 = vector.load %arg9[%c1, %c0_50, %c0_51] : memref<4x8x1xf32, #tpu.memory_space<vmem>>, vector<1x8x1xf32>
      %83 = vector.shape_cast %82 : vector<1x8x1xf32> to vector<8x1xf32>
      %cst_52 = arith.constant dense<0xFF800000> : vector<8xf32>
      %84 = vector.multi_reduction <maximumf>, %81, %cst_52 [1] : vector<8x8xf32> to vector<8xf32>
      %85 = vector.shape_cast %84 : vector<8xf32> to vector<8x1xf32>
      %86 = arith.maximumf %83, %85 : vector<8x1xf32>
      %87 = arith.subf %83, %86 : vector<8x1xf32>
      %88 = math.exp %87 : vector<8x1xf32>
      %89 = vector.broadcast %86 : vector<8x1xf32> to vector<8x8xf32>
      %90 = arith.subf %81, %89 : vector<8x8xf32>
      %91 = math.exp %90 : vector<8x8xf32>
      %c1_53 = arith.constant 1 : index
      %c0_54 = arith.constant 0 : index
      %c0_55 = arith.constant 0 : index
      %92 = vector.load %arg10[%c1_53, %c0_54, %c0_55] : memref<4x8x1xf32, #tpu.memory_space<vmem>>, vector<1x8x1xf32>
      %93 = vector.shape_cast %92 : vector<1x8x1xf32> to vector<8x1xf32>
      %94 = arith.mulf %88, %93 : vector<8x1xf32>
      %cst_56 = arith.constant dense<0.000000e+00> : vector<8xf32>
      %95 = vector.multi_reduction <add>, %91, %cst_56 [1] : vector<8x8xf32> to vector<8xf32>
      %96 = vector.shape_cast %95 : vector<8xf32> to vector<8x1xf32>
      %97 = arith.addf %94, %96 : vector<8x1xf32>
      %c1_57 = arith.constant 1 : index
      %c0_58 = arith.constant 0 : index
      %c0_59 = arith.constant 0 : index
      %98 = vector.load %arg10[%c1_57, %c0_58, %c0_59] : memref<4x8x1xf32, #tpu.memory_space<vmem>>, vector<1x8x1xf32>
      %99 = vector.shape_cast %98 : vector<1x8x1xf32> to vector<8x1xf32>
      %100 = vector.shape_cast %97 : vector<8x1xf32> to vector<1x8x1xf32>
      tpu.vector_store %arg10[%c1_57, %c0_58, %c0_59], %100 {strides = array<i32>} : memref<4x8x1xf32, #tpu.memory_space<vmem>>, vector<1x8x1xf32>,
      %c1_60 = arith.constant 1 : index
      %c0_61 = arith.constant 0 : index
      %c0_62 = arith.constant 0 : index
      %101 = vector.load %arg11[%c1_60, %c0_61, %c0_62] : memref<4x8x32xf32, #tpu.memory_space<vmem>>, vector<1x8x32xf32>
      %102 = vector.shape_cast %101 : vector<1x8x32xf32> to vector<8x32xf32>
      %103 = vector.broadcast %88 : vector<8x1xf32> to vector<8x32xf32>
      %104 = arith.mulf %103, %102 : vector<8x32xf32>
      %cst_63 = arith.constant dense<0.000000e+00> : vector<8x32xf32>
      %105 = tpu.matmul %91, %74, %cst_63 {dimension_numbers = #tpu.dot_dimension_numbers<[1], [0], [0], [1], [0, 0, 1, 1], [], []>} : vector<8x8xf32>, vector<8x32xf32>, vector<8x32xf32> -> vector<8x32xf32>
      %106 = arith.addf %104, %105 : vector<8x32xf32>
      %c1_64 = arith.constant 1 : index
      %c0_65 = arith.constant 0 : index
      %c0_66 = arith.constant 0 : index
      %107 = vector.load %arg11[%c1_64, %c0_65, %c0_66] : memref<4x8x32xf32, #tpu.memory_space<vmem>>, vector<1x8x32xf32>
      %108 = vector.shape_cast %107 : vector<1x8x32xf32> to vector<8x32xf32>
      %109 = vector.shape_cast %106 : vector<8x32xf32> to vector<1x8x32xf32>
      tpu.vector_store %arg11[%c1_64, %c0_65, %c0_66], %109 {strides = array<i32>} : memref<4x8x32xf32, #tpu.memory_space<vmem>>, vector<1x8x32xf32>,
      %c1_67 = arith.constant 1 : index
      %c0_68 = arith.constant 0 : index
      %c0_69 = arith.constant 0 : index
      %110 = vector.load %arg9[%c1_67, %c0_68, %c0_69] : memref<4x8x1xf32, #tpu.memory_space<vmem>>, vector<1x8x1xf32>
      %111 = vector.shape_cast %110 : vector<1x8x1xf32> to vector<8x1xf32>
      %112 = vector.shape_cast %86 : vector<8x1xf32> to vector<1x8x1xf32>
      tpu.vector_store %arg9[%c1_67, %c0_68, %c0_69], %112 {strides = array<i32>} : memref<4x8x1xf32, #tpu.memory_space<vmem>>, vector<1x8x1xf32>,
      %c0_70 = arith.constant 0 : index
      %c0_71 = arith.constant 0 : index
      %c64 = arith.constant 64 : index
      %113 = vector.load %arg3[%c0_70, %c0_71, %c64] : memref<1x8x128xf32, #tpu.memory_space<vmem>>, vector<1x8x32xf32>
      %114 = vector.shape_cast %113 : vector<1x8x32xf32> to vector<8x32xf32>
      %c0_72 = arith.constant 0 : index
      %c0_73 = arith.constant 0 : index
      %c64_74 = arith.constant 64 : index
      %115 = vector.load %arg4[%c0_72, %c0_73, %c64_74] : memref<1x8x128xf32, #tpu.memory_space<vmem>>, vector<1x8x32xf32>
      %116 = vector.shape_cast %115 : vector<1x8x32xf32> to vector<8x32xf32>
      %c0_75 = arith.constant 0 : index
      %c0_76 = arith.constant 0 : index
      %c64_77 = arith.constant 64 : index
      %117 = vector.load %arg5[%c0_75, %c0_76, %c64_77] : memref<1x8x128xf32, #tpu.memory_space<vmem>>, vector<1x8x32xf32>
      %118 = vector.shape_cast %117 : vector<1x8x32xf32> to vector<8x32xf32>
      %cst_78 = arith.constant dense<0.000000e+00> : vector<8x8xf32>
      %119 = tpu.matmul %114, %116, %cst_78 {dimension_numbers = #tpu.dot_dimension_numbers<[1], [1], [0], [0], [0, 0, 1, 0], [], []>} : vector<8x32xf32>, vector<8x32xf32>, vector<8x8xf32> -> vector<8x8xf32>
      %120 = vector.broadcast %13 : f32 to vector<8x8xf32>
      %121 = arith.mulf %119, %120 : vector<8x8xf32>
      %122 = vector.broadcast %15 : vector<1x8xf32> to vector<8x8xf32>
      %123 = arith.addf %121, %122 : vector<8x8xf32>
      %cst_79 = arith.constant -1.000000e+30 : f32
      %124 = vector.broadcast %cst_79 : f32 to vector<8x8xf32>
      %125 = arith.select %24, %123, %124 : vector<8x8xi1>, vector<8x8xf32>
      %c2 = arith.constant 2 : index
      %c0_80 = arith.constant 0 : index
      %c0_81 = arith.constant 0 : index
      %126 = vector.load %arg9[%c2, %c0_80, %c0_81] : memref<4x8x1xf32, #tpu.memory_space<vmem>>, vector<1x8x1xf32>
      %127 = vector.shape_cast %126 : vector<1x8x1xf32> to vector<8x1xf32>
      %cst_82 = arith.constant dense<0xFF800000> : vector<8xf32>
      %128 = vector.multi_reduction <maximumf>, %125, %cst_82 [1] : vector<8x8xf32> to vector<8xf32>
      %129 = vector.shape_cast %128 : vector<8xf32> to vector<8x1xf32>
      %130 = arith.maximumf %127, %129 : vector<8x1xf32>
      %131 = arith.subf %127, %130 : vector<8x1xf32>
      %132 = math.exp %131 : vector<8x1xf32>
      %133 = vector.broadcast %130 : vector<8x1xf32> to vector<8x8xf32>
      %134 = arith.subf %125, %133 : vector<8x8xf32>
      %135 = math.exp %134 : vector<8x8xf32>
      %c2_83 = arith.constant 2 : index
      %c0_84 = arith.constant 0 : index
      %c0_85 = arith.constant 0 : index
      %136 = vector.load %arg10[%c2_83, %c0_84, %c0_85] : memref<4x8x1xf32, #tpu.memory_space<vmem>>, vector<1x8x1xf32>
      %137 = vector.shape_cast %136 : vector<1x8x1xf32> to vector<8x1xf32>
      %138 = arith.mulf %132, %137 : vector<8x1xf32>
      %cst_86 = arith.constant dense<0.000000e+00> : vector<8xf32>
      %139 = vector.multi_reduction <add>, %135, %cst_86 [1] : vector<8x8xf32> to vector<8xf32>
      %140 = vector.shape_cast %139 : vector<8xf32> to vector<8x1xf32>
      %141 = arith.addf %138, %140 : vector<8x1xf32>
      %c2_87 = arith.constant 2 : index
      %c0_88 = arith.constant 0 : index
      %c0_89 = arith.constant 0 : index
      %142 = vector.load %arg10[%c2_87, %c0_88, %c0_89] : memref<4x8x1xf32, #tpu.memory_space<vmem>>, vector<1x8x1xf32>
      %143 = vector.shape_cast %142 : vector<1x8x1xf32> to vector<8x1xf32>
      %144 = vector.shape_cast %141 : vector<8x1xf32> to vector<1x8x1xf32>
      tpu.vector_store %arg10[%c2_87, %c0_88, %c0_89], %144 {strides = array<i32>} : memref<4x8x1xf32, #tpu.memory_space<vmem>>, vector<1x8x1xf32>,
      %c2_90 = arith.constant 2 : index
      %c0_91 = arith.constant 0 : index
      %c0_92 = arith.constant 0 : index
      %145 = vector.load %arg11[%c2_90, %c0_91, %c0_92] : memref<4x8x32xf32, #tpu.memory_space<vmem>>, vector<1x8x32xf32>
      %146 = vector.shape_cast %145 : vector<1x8x32xf32> to vector<8x32xf32>
      %147 = vector.broadcast %132 : vector<8x1xf32> to vector<8x32xf32>
      %148 = arith.mulf %147, %146 : vector<8x32xf32>
      %cst_93 = arith.constant dense<0.000000e+00> : vector<8x32xf32>
      %149 = tpu.matmul %135, %118, %cst_93 {dimension_numbers = #tpu.dot_dimension_numbers<[1], [0], [0], [1], [0, 0, 1, 1], [], []>} : vector<8x8xf32>, vector<8x32xf32>, vector<8x32xf32> -> vector<8x32xf32>
      %150 = arith.addf %148, %149 : vector<8x32xf32>
      %c2_94 = arith.constant 2 : index
      %c0_95 = arith.constant 0 : index
      %c0_96 = arith.constant 0 : index
      %151 = vector.load %arg11[%c2_94, %c0_95, %c0_96] : memref<4x8x32xf32, #tpu.memory_space<vmem>>, vector<1x8x32xf32>
      %152 = vector.shape_cast %151 : vector<1x8x32xf32> to vector<8x32xf32>
      %153 = vector.shape_cast %150 : vector<8x32xf32> to vector<1x8x32xf32>
      tpu.vector_store %arg11[%c2_94, %c0_95, %c0_96], %153 {strides = array<i32>} : memref<4x8x32xf32, #tpu.memory_space<vmem>>, vector<1x8x32xf32>,
      %c2_97 = arith.constant 2 : index
      %c0_98 = arith.constant 0 : index
      %c0_99 = arith.constant 0 : index
      %154 = vector.load %arg9[%c2_97, %c0_98, %c0_99] : memref<4x8x1xf32, #tpu.memory_space<vmem>>, vector<1x8x1xf32>
      %155 = vector.shape_cast %154 : vector<1x8x1xf32> to vector<8x1xf32>
      %156 = vector.shape_cast %130 : vector<8x1xf32> to vector<1x8x1xf32>
      tpu.vector_store %arg9[%c2_97, %c0_98, %c0_99], %156 {strides = array<i32>} : memref<4x8x1xf32, #tpu.memory_space<vmem>>, vector<1x8x1xf32>,
      %c0_100 = arith.constant 0 : index
      %c0_101 = arith.constant 0 : index
      %c96 = arith.constant 96 : index
      %157 = vector.load %arg3[%c0_100, %c0_101, %c96] : memref<1x8x128xf32, #tpu.memory_space<vmem>>, vector<1x8x32xf32>
      %158 = vector.shape_cast %157 : vector<1x8x32xf32> to vector<8x32xf32>
      %c0_102 = arith.constant 0 : index
      %c0_103 = arith.constant 0 : index
      %c96_104 = arith.constant 96 : index
      %159 = vector.load %arg4[%c0_102, %c0_103, %c96_104] : memref<1x8x128xf32, #tpu.memory_space<vmem>>, vector<1x8x32xf32>
      %160 = vector.shape_cast %159 : vector<1x8x32xf32> to vector<8x32xf32>
      %c0_105 = arith.constant 0 : index
      %c0_106 = arith.constant 0 : index
      %c96_107 = arith.constant 96 : index
      %161 = vector.load %arg5[%c0_105, %c0_106, %c96_107] : memref<1x8x128xf32, #tpu.memory_space<vmem>>, vector<1x8x32xf32>
      %162 = vector.shape_cast %161 : vector<1x8x32xf32> to vector<8x32xf32>
      %cst_108 = arith.constant dense<0.000000e+00> : vector<8x8xf32>
      %163 = tpu.matmul %158, %160, %cst_108 {dimension_numbers = #tpu.dot_dimension_numbers<[1], [1], [0], [0], [0, 0, 1, 0], [], []>} : vector<8x32xf32>, vector<8x32xf32>, vector<8x8xf32> -> vector<8x8xf32>
      %164 = vector.broadcast %13 : f32 to vector<8x8xf32>
      %165 = arith.mulf %163, %164 : vector<8x8xf32>
      %166 = vector.broadcast %15 : vector<1x8xf32> to vector<8x8xf32>
      %167 = arith.addf %165, %166 : vector<8x8xf32>
      %cst_109 = arith.constant -1.000000e+30 : f32
      %168 = vector.broadcast %cst_109 : f32 to vector<8x8xf32>
      %169 = arith.select %24, %167, %168 : vector<8x8xi1>, vector<8x8xf32>
      %c3 = arith.constant 3 : index
      %c0_110 = arith.constant 0 : index
      %c0_111 = arith.constant 0 : index
      %170 = vector.load %arg9[%c3, %c0_110, %c0_111] : memref<4x8x1xf32, #tpu.memory_space<vmem>>, vector<1x8x1xf32>
      %171 = vector.shape_cast %170 : vector<1x8x1xf32> to vector<8x1xf32>
      %cst_112 = arith.constant dense<0xFF800000> : vector<8xf32>
      %172 = vector.multi_reduction <maximumf>, %169, %cst_112 [1] : vector<8x8xf32> to vector<8xf32>
      %173 = vector.shape_cast %172 : vector<8xf32> to vector<8x1xf32>
      %174 = arith.maximumf %171, %173 : vector<8x1xf32>
      %175 = arith.subf %171, %174 : vector<8x1xf32>
      %176 = math.exp %175 : vector<8x1xf32>
      %177 = vector.broadcast %174 : vector<8x1xf32> to vector<8x8xf32>
      %178 = arith.subf %169, %177 : vector<8x8xf32>
      %179 = math.exp %178 : vector<8x8xf32>
      %c3_113 = arith.constant 3 : index
      %c0_114 = arith.constant 0 : index
      %c0_115 = arith.constant 0 : index
      %180 = vector.load %arg10[%c3_113, %c0_114, %c0_115] : memref<4x8x1xf32, #tpu.memory_space<vmem>>, vector<1x8x1xf32>
      %181 = vector.shape_cast %180 : vector<1x8x1xf32> to vector<8x1xf32>
      %182 = arith.mulf %176, %181 : vector<8x1xf32>
      %cst_116 = arith.constant dense<0.000000e+00> : vector<8xf32>
      %183 = vector.multi_reduction <add>, %179, %cst_116 [1] : vector<8x8xf32> to vector<8xf32>
      %184 = vector.shape_cast %183 : vector<8xf32> to vector<8x1xf32>
      %185 = arith.addf %182, %184 : vector<8x1xf32>
      %c3_117 = arith.constant 3 : index
      %c0_118 = arith.constant 0 : index
      %c0_119 = arith.constant 0 : index
      %186 = vector.load %arg10[%c3_117, %c0_118, %c0_119] : memref<4x8x1xf32, #tpu.memory_space<vmem>>, vector<1x8x1xf32>
      %187 = vector.shape_cast %186 : vector<1x8x1xf32> to vector<8x1xf32>
      %188 = vector.shape_cast %185 : vector<8x1xf32> to vector<1x8x1xf32>
      tpu.vector_store %arg10[%c3_117, %c0_118, %c0_119], %188 {strides = array<i32>} : memref<4x8x1xf32, #tpu.memory_space<vmem>>, vector<1x8x1xf32>,
      %c3_120 = arith.constant 3 : index
      %c0_121 = arith.constant 0 : index
      %c0_122 = arith.constant 0 : index
      %189 = vector.load %arg11[%c3_120, %c0_121, %c0_122] : memref<4x8x32xf32, #tpu.memory_space<vmem>>, vector<1x8x32xf32>
      %190 = vector.shape_cast %189 : vector<1x8x32xf32> to vector<8x32xf32>
      %191 = vector.broadcast %176 : vector<8x1xf32> to vector<8x32xf32>
      %192 = arith.mulf %191, %190 : vector<8x32xf32>
      %cst_123 = arith.constant dense<0.000000e+00> : vector<8x32xf32>
      %193 = tpu.matmul %179, %162, %cst_123 {dimension_numbers = #tpu.dot_dimension_numbers<[1], [0], [0], [1], [0, 0, 1, 1], [], []>} : vector<8x8xf32>, vector<8x32xf32>, vector<8x32xf32> -> vector<8x32xf32>
      %194 = arith.addf %192, %193 : vector<8x32xf32>
      %c3_124 = arith.constant 3 : index
      %c0_125 = arith.constant 0 : index
      %c0_126 = arith.constant 0 : index
      %195 = vector.load %arg11[%c3_124, %c0_125, %c0_126] : memref<4x8x32xf32, #tpu.memory_space<vmem>>, vector<1x8x32xf32>
      %196 = vector.shape_cast %195 : vector<1x8x32xf32> to vector<8x32xf32>
      %197 = vector.shape_cast %194 : vector<8x32xf32> to vector<1x8x32xf32>
      tpu.vector_store %arg11[%c3_124, %c0_125, %c0_126], %197 {strides = array<i32>} : memref<4x8x32xf32, #tpu.memory_space<vmem>>, vector<1x8x32xf32>,
      %c3_127 = arith.constant 3 : index
      %c0_128 = arith.constant 0 : index
      %c0_129 = arith.constant 0 : index
      %198 = vector.load %arg9[%c3_127, %c0_128, %c0_129] : memref<4x8x1xf32, #tpu.memory_space<vmem>>, vector<1x8x1xf32>
      %199 = vector.shape_cast %198 : vector<1x8x1xf32> to vector<8x1xf32>
      %200 = vector.shape_cast %174 : vector<8x1xf32> to vector<1x8x1xf32>
      tpu.vector_store %arg9[%c3_127, %c0_128, %c0_129], %200 {strides = array<i32>} : memref<4x8x1xf32, #tpu.memory_space<vmem>>, vector<1x8x1xf32>,
    } else {
    }
    %c0_i32_3 = arith.constant 0 : i32
    %9 = arith.cmpi eq, %arg2, %c0_i32_3 : i32
    %10 = arith.extui %9 : i1 to i32
    %c0_i32_4 = arith.constant 0 : i32
    %11 = arith.cmpi ne, %10, %c0_i32_4 : i32
    scf.if %11 {
      %c0 = arith.constant 0 : index
      %c0_5 = arith.constant 0 : index
      %c0_6 = arith.constant 0 : index
      %12 = vector.load %arg10[%c0, %c0_5, %c0_6] : memref<4x8x1xf32, #tpu.memory_space<vmem>>, vector<1x8x1xf32>
      %13 = vector.shape_cast %12 : vector<1x8x1xf32> to vector<8x1xf32>
      %14 = tpu.reciprocal %13 {approx = true} : vector<8x1xf32> -> vector<8x1xf32>
      %c0_7 = arith.constant 0 : index
      %c0_8 = arith.constant 0 : index
      %c0_9 = arith.constant 0 : index
      %15 = vector.load %arg11[%c0_7, %c0_8, %c0_9] : memref<4x8x32xf32, #tpu.memory_space<vmem>>, vector<1x8x32xf32>
      %16 = vector.shape_cast %15 : vector<1x8x32xf32> to vector<8x32xf32>
      %17 = vector.broadcast %14 : vector<8x1xf32> to vector<8x32xf32>
      %18 = arith.mulf %16, %17 : vector<8x32xf32>
      %c1 = arith.constant 1 : index
      %c0_10 = arith.constant 0 : index
      %c0_11 = arith.constant 0 : index
      %19 = vector.load %arg10[%c1, %c0_10, %c0_11] : memref<4x8x1xf32, #tpu.memory_space<vmem>>, vector<1x8x1xf32>
      %20 = vector.shape_cast %19 : vector<1x8x1xf32> to vector<8x1xf32>
      %21 = tpu.reciprocal %20 {approx = true} : vector<8x1xf32> -> vector<8x1xf32>
      %c1_12 = arith.constant 1 : index
      %c0_13 = arith.constant 0 : index
      %c0_14 = arith.constant 0 : index
      %22 = vector.load %arg11[%c1_12, %c0_13, %c0_14] : memref<4x8x32xf32, #tpu.memory_space<vmem>>, vector<1x8x32xf32>
      %23 = vector.shape_cast %22 : vector<1x8x32xf32> to vector<8x32xf32>
      %24 = vector.broadcast %21 : vector<8x1xf32> to vector<8x32xf32>
      %25 = arith.mulf %23, %24 : vector<8x32xf32>
      %c2 = arith.constant 2 : index
      %c0_15 = arith.constant 0 : index
      %c0_16 = arith.constant 0 : index
      %26 = vector.load %arg10[%c2, %c0_15, %c0_16] : memref<4x8x1xf32, #tpu.memory_space<vmem>>, vector<1x8x1xf32>
      %27 = vector.shape_cast %26 : vector<1x8x1xf32> to vector<8x1xf32>
      %28 = tpu.reciprocal %27 {approx = true} : vector<8x1xf32> -> vector<8x1xf32>
      %c2_17 = arith.constant 2 : index
      %c0_18 = arith.constant 0 : index
      %c0_19 = arith.constant 0 : index
      %29 = vector.load %arg11[%c2_17, %c0_18, %c0_19] : memref<4x8x32xf32, #tpu.memory_space<vmem>>, vector<1x8x32xf32>
      %30 = vector.shape_cast %29 : vector<1x8x32xf32> to vector<8x32xf32>
      %31 = vector.broadcast %28 : vector<8x1xf32> to vector<8x32xf32>
      %32 = arith.mulf %30, %31 : vector<8x32xf32>
      %c3 = arith.constant 3 : index
      %c0_20 = arith.constant 0 : index
      %c0_21 = arith.constant 0 : index
      %33 = vector.load %arg10[%c3, %c0_20, %c0_21] : memref<4x8x1xf32, #tpu.memory_space<vmem>>, vector<1x8x1xf32>
      %34 = vector.shape_cast %33 : vector<1x8x1xf32> to vector<8x1xf32>
      %35 = tpu.reciprocal %34 {approx = true} : vector<8x1xf32> -> vector<8x1xf32>
      %c3_22 = arith.constant 3 : index
      %c0_23 = arith.constant 0 : index
      %c0_24 = arith.constant 0 : index
      %36 = vector.load %arg11[%c3_22, %c0_23, %c0_24] : memref<4x8x32xf32, #tpu.memory_space<vmem>>, vector<1x8x32xf32>
      %37 = vector.shape_cast %36 : vector<1x8x32xf32> to vector<8x32xf32>
      %38 = vector.broadcast %35 : vector<8x1xf32> to vector<8x32xf32>
      %39 = arith.mulf %37, %38 : vector<8x32xf32>
      %40 = tpu.concatenate %18, %25, %32, %39 in 1 : vector<8x32xf32>, vector<8x32xf32>, vector<8x32xf32>, vector<8x32xf32> -> vector<8x128xf32>
      %c0_25 = arith.constant 0 : index
      %c0_26 = arith.constant 0 : index
      %c0_27 = arith.constant 0 : index
      %41 = vector.load %arg8[%c0_25, %c0_26, %c0_27] : memref<1x8x128xf32, #tpu.memory_space<vmem>>, vector<1x8x128xf32>
      %42 = vector.shape_cast %41 : vector<1x8x128xf32> to vector<8x128xf32>
      %43 = vector.shape_cast %40 : vector<8x128xf32> to vector<1x8x128xf32>
      tpu.vector_store %arg8[%c0_25, %c0_26, %c0_27], %43 {strides = array<i32>} : memref<1x8x128xf32, #tpu.memory_space<vmem>>, vector<1x8x128xf32>,
    } else {
    }
    return
  }
  func.func @transform_0(%arg0: i32, %arg1: i32, %arg2: i32) -> (i32, i32, i32) {
    %c0_i32 = arith.constant 0 : i32
    %c0_i32_0 = arith.constant 0 : i32
    return %arg0, %arg1, %c0_i32 : i32, i32, i32
  }
  func.func @transform_1(%arg0: i32, %arg1: i32, %arg2: i32) -> (i32, i32, i32) {
    %c0_i32 = arith.constant 0 : i32
    %c0_i32_0 = arith.constant 0 : i32
    return %arg0, %arg2, %c0_i32 : i32, i32, i32
  }
  func.func @transform_2(%arg0: i32, %arg1: i32, %arg2: i32) -> (i32, i32, i32) {
    %c0_i32 = arith.constant 0 : i32
    %c0_i32_0 = arith.constant 0 : i32
    return %arg0, %arg2, %c0_i32 : i32, i32, i32
  }
  func.func @transform_3(%arg0: i32, %arg1: i32, %arg2: i32) -> (i32, i32, i32) {
    %c0_i32 = arith.constant 0 : i32
    %c0_i32_0 = arith.constant 0 : i32
    return %arg0, %c0_i32, %arg2 : i32, i32, i32
  }
  func.func @transform_4(%arg0: i32, %arg1: i32, %arg2: i32) -> i32 {
    %c0_i32 = arith.constant 0 : i32
    %c0_i32_0 = arith.constant 0 : i32
    return %c0_i32 : i32
  }
  func.func @transform_5(%arg0: i32, %arg1: i32, %arg2: i32) -> (i32, i32, i32) {
    %c0_i32 = arith.constant 0 : i32
    %c0_i32_0 = arith.constant 0 : i32
    return %arg0, %arg1, %c0_i32 : i32, i32, i32
  }
}

</mosaic_0001>

<llo_original>
// kernel: ds_attention.1
$region0: #{ds_attention.1}
  #allocation0 [shape = 'u32[]', space=smem, size = 0x4, offset = 0x4, fixed_abs, tag = 'smem constant byte address 0x4 - core index']
  #allocation1 [shape = 'u32[144,128]{1,0:T(1,128)}', space=vmem, size = 0x12000, scoped, tag = 'internal scratch']
  #allocation2 [shape = 'f32[4,8,1]{2,1,0:T(8,128)}', space=vmem, size = 0x4000, scoped, tag = 'scratch operand']
  #allocation3 [shape = 'f32[4,8,1]{2,1,0:T(8,128)}', space=vmem, size = 0x4000, scoped, tag = 'scratch operand']
  #allocation4 [shape = 'f32[4,8,32]{2,1,0:T(8,128)}', space=vmem, size = 0x4000, scoped, tag = 'scratch operand']
  %s0 = inlined_call_operand.vmem [shape: f32[2,8,128], index: 0, kind: input, shape index: {}]
  %s1 = inlined_call_operand.vmem [shape: f32[2,8,128], index: 1, kind: input, shape index: {}]
  %s2 = inlined_call_operand.vmem [shape: f32[2,8,128], index: 2, kind: input, shape index: {}]
  %s3 = inlined_call_operand.vmem [shape: f32[2,1,8], index: 3, kind: input, shape index: {}]
  %s4 = inlined_call_operand.vmem [shape: f32[2], index: 4, kind: input, shape index: {}]
  %s5 = inlined_call_operand.vmem [shape: f32[2,8,128], index: 5, kind: output, shape index: {}]
  %s6 = sld [smem:[#allocation0]]
  $region69: #{ds_attention.1} parent=0
    _
  %s8 = ssub.s32 1, %s6
  %s9 = scalar_select 0, %s8, %s6
  $region1: #{ds_attention.1} parent=0
    #allocation5 [shape = 'u8[512]{0}', space=smem, size = 0x200, scoped, tag = 'input window, operand 4, single buffered']
    #allocation6 [shape = 's32[2]{0}', space=sflag, size = 0x8, scoped, tag = 'scoped memory for ds_attention.1']
    %10 = vsyncpa [#allocation6], 0
    loop: start=0, step=1, limit=4
    $region2: #{ds_attention.1} parent=1 // loop_pre_header
      _
    $region3: #{ds_attention.1} parent=1 // loop_header
      %s12 = sphi 0, %s16
      %p13 = scmp.ge.s32.totalorder %s12, 4
      %s19 = sphi 0, %s38
      %s20 = sphi 0, %s34
      %s21 = sphi 0, %s30
      %s22 = sphi 0, %s19
      %s23 = sphi 0, %s20
      %s24 = sphi 0, %s21
      %s25 = sphi 0, %s22
      %s26 = sphi 0, %s23
      %s27 = sphi 0, %s24
      %s43 = sphi 0, %s45
      %s46 = sphi 0, %s43
      %s47 = sphi 0, %s46
      %s63 = sphi 0, %s47
      %s71 = sphi 0, %s73
      %s74 = sphi 0, %s71
      %s75 = sphi 0, %s74
      %s91 = sphi 0, %s75
      %s99 = sphi 0, %s101
      %s102 = sphi 0, %s99
      %s103 = sphi 0, %s102
      %s119 = sphi 0, %s103
      %s127 = sphi 0, %s129
      %s130 = sphi 0, %s127
      %s131 = sphi 0, %s130
      %s147 = sphi 0, %s131
      %s151 = sphi 0, %s151
      %s153 = sphi 0, %s151
      %s154 = sphi 0, %s153
      %s168 = sphi 0, %s154
      %s176 = sphi 0, %s178
      %s179 = sphi 0, %s176
      %s180 = sphi 0, %s179
      %s196 = sphi 0, %s180
    $region4: #{ds_attention.1} parent=1 // loop_header_branch
      %15 = sbr.rel (%p13) target = $region8
    $region5: #{ds_attention.1} parent=1 // loop_body
      %s17 = ssub.s32 %s12, 1
      %s18 = ssub.s32 %s12, 2
      %s28 = sadd.s32 1, %s21
      %p29 = scmp.ge.s32.totalorder %s28, 1
      %s30 = scalar_select %p29, 0, %s28
      %s31 = sadd.s32 1, %s20
      %s32 = scalar_select %p29, %s31, %s20
      %p33 = scmp.ge.s32.totalorder %s32, 1
      %s34 = scalar_select %p33, 0, %s32
      %s35 = sadd.s32 1, %s19
      %s36 = scalar_select %p33, %s35, %s19
      %p37 = scmp.ge.s32.totalorder %s36, 2
      %s38 = scalar_select %p37, 0, %s36
      %s39 = ssub.s32 %s19, %s38
      %s40 = ssub.s32 %s20, %s34
      %s41 = sor.u32 %s39, %s40
      %p42 = scmp.eq.s32.totalorder %s41, 0
      %s44 = sadd.s32 %s43, 1
      %s45 = scalar_select %p42, %s43, %s44
      %p48 = pneg %p42
      %p49 = scmp.eq.s32.totalorder %s12, 1
      %p50 = por %p48, %p49
      %p51 = scmp.ne.s32.totalorder %s43, %s46
      %p52 = scmp.eq.s32.totalorder %s12, 0
      %p53 = por %p51, %p52
      %p54 = scmp.ne.s32.totalorder %s43, %s46
      %p55 = scmp.eq.s32.totalorder %s17, 1
      %p56 = por %p54, %p55
      %p57 = scmp.ne.s32.totalorder %s46, %s47
      %p58 = scmp.eq.s32.totalorder %s17, 0
      %p59 = por %p57, %p58
      %p60 = scmp.ne.s32.totalorder %s46, %s47
      %p61 = scmp.eq.s32.totalorder %s18, 1
      %p62 = por %p60, %p61
      %p64 = scmp.ne.s32.totalorder %s47, %s63
      %p65 = scmp.eq.s32.totalorder %s18, 0
      %p66 = por %p64, %p65
      %s67 = ssub.s32 %s19, %s38
      %s68 = ssub.s32 %s21, %s30
      %s69 = sor.u32 %s67, %s68
      %p70 = scmp.eq.s32.totalorder %s69, 0
      %s72 = sadd.s32 %s71, 1
      %s73 = scalar_select %p70, %s71, %s72
      %p76 = pneg %p70
      %p77 = scmp.eq.s32.totalorder %s12, 1
      %p78 = por %p76, %p77
      %p79 = scmp.ne.s32.totalorder %s71, %s74
      %p80 = scmp.eq.s32.totalorder %s12, 0
      %p81 = por %p79, %p80
      %p82 = scmp.ne.s32.totalorder %s71, %s74
      %p83 = scmp.eq.s32.totalorder %s17, 1
      %p84 = por %p82, %p83
      %p85 = scmp.ne.s32.totalorder %s74, %s75
      %p86 = scmp.eq.s32.totalorder %s17, 0
      %p87 = por %p85, %p86
      %p88 = scmp.ne.s32.totalorder %s74, %s75
      %p89 = scmp.eq.s32.totalorder %s18, 1
      %p90 = por %p88, %p89
      %p92 = scmp.ne.s32.totalorder %s75, %s91
      %p93 = scmp.eq.s32.totalorder %s18, 0
      %p94 = por %p92, %p93
      %s95 = ssub.s32 %s19, %s38
      %s96 = ssub.s32 %s21, %s30
      %s97 = sor.u32 %s95, %s96
      %p98 = scmp.eq.s32.totalorder %s97, 0
      %s100 = sadd.s32 %s99, 1
      %s101 = scalar_select %p98, %s99, %s100
      %p104 = pneg %p98
      %p105 = scmp.eq.s32.totalorder %s12, 1
      %p106 = por %p104, %p105
      %p107 = scmp.ne.s32.totalorder %s99, %s102
      %p108 = scmp.eq.s32.totalorder %s12, 0
      %p109 = por %p107, %p108
      %p110 = scmp.ne.s32.totalorder %s99, %s102
      %p111 = scmp.eq.s32.totalorder %s17, 1
      %p112 = por %p110, %p111
      %p113 = scmp.ne.s32.totalorder %s102, %s103
      %p114 = scmp.eq.s32.totalorder %s17, 0
      %p115 = por %p113, %p114
      %p116 = scmp.ne.s32.totalorder %s102, %s103
      %p117 = scmp.eq.s32.totalorder %s18, 1
      %p118 = por %p116, %p117
      %p120 = scmp.ne.s32.totalorder %s103, %s119
      %p121 = scmp.eq.s32.totalorder %s18, 0
      %p122 = por %p120, %p121
      %s123 = ssub.s32 %s19, %s38
      %s124 = ssub.s32 %s21, %s30
      %s125 = sor.u32 %s123, %s124
      %p126 = scmp.eq.s32.totalorder %s125, 0
      %s128 = sadd.s32 %s127, 1
      %s129 = scalar_select %p126, %s127, %s128
      %p132 = pneg %p126
      %p133 = scmp.eq.s32.totalorder %s12, 1
      %p134 = por %p132, %p133
      %p135 = scmp.ne.s32.totalorder %s127, %s130
      %p136 = scmp.eq.s32.totalorder %s12, 0
      %p137 = por %p135, %p136
      %p138 = scmp.ne.s32.totalorder %s127, %s130
      %p139 = scmp.eq.s32.totalorder %s17, 1
      %p140 = por %p138, %p139
      %p141 = scmp.ne.s32.totalorder %s130, %s131
      %p142 = scmp.eq.s32.totalorder %s17, 0
      %p143 = por %p141, %p142
      %p144 = scmp.ne.s32.totalorder %s130, %s131
      %p145 = scmp.eq.s32.totalorder %s18, 1
      %p146 = por %p144, %p145
      %p148 = scmp.ne.s32.totalorder %s131, %s147
      %p149 = scmp.eq.s32.totalorder %s18, 0
      %p150 = por %p148, %p149
      %s152 = sadd.s32 %s151, 1
      %p155 = scmp.eq.s32.totalorder %s12, 1
      %p156 = scmp.ne.s32.totalorder %s151, %s153
      %p157 = scmp.eq.s32.totalorder %s12, 0
      %p158 = por %p156, %p157
      %p159 = scmp.ne.s32.totalorder %s151, %s153
      %p160 = scmp.eq.s32.totalorder %s17, 1
      %p161 = por %p159, %p160
      %p162 = scmp.ne.s32.totalorder %s153, %s154
      %p163 = scmp.eq.s32.totalorder %s17, 0
      %p164 = por %p162, %p163
      %p165 = scmp.ne.s32.totalorder %s153, %s154
      %p166 = scmp.eq.s32.totalorder %s18, 1
      %p167 = por %p165, %p166
      %p169 = scmp.ne.s32.totalorder %s154, %s168
      %p170 = scmp.eq.s32.totalorder %s18, 0
      %p171 = por %p169, %p170
      %s172 = ssub.s32 %s19, %s38
      %s173 = ssub.s32 %s20, %s34
      %s174 = sor.u32 %s172, %s173
      %p175 = scmp.eq.s32.totalorder %s174, 0
      %s177 = sadd.s32 %s176, 1
      %s178 = scalar_select %p175, %s176, %s177
      %p181 = pneg %p175
      %p182 = scmp.eq.s32.totalorder %s12, 1
      %p183 = por %p181, %p182
      %p184 = scmp.ne.s32.totalorder %s176, %s179
      %p185 = scmp.eq.s32.totalorder %s12, 0
      %p186 = por %p184, %p185
      %p187 = scmp.ne.s32.totalorder %s176, %s179
      %p188 = scmp.eq.s32.totalorder %s17, 1
      %p189 = por %p187, %p188
      %p190 = scmp.ne.s32.totalorder %s179, %s180
      %p191 = scmp.eq.s32.totalorder %s17, 0
      %p192 = por %p190, %p191
      %p193 = scmp.ne.s32.totalorder %s179, %s180
      %p194 = scmp.eq.s32.totalorder %s18, 1
      %p195 = por %p193, %p194
      %p197 = scmp.ne.s32.totalorder %s180, %s196
      %p198 = scmp.eq.s32.totalorder %s18, 0
      %p199 = por %p197, %p198
      %p200 = scmp.le.s32.totalorder 1, %s12
      %p201 = scmp.lt.s32.totalorder %s12, 3
      %p202 = pnand %p200, %p201
      %p203 = pneg %p202
      // Predicated region
      $region9: #{ds_attention.1} parent=5 // pred_check
        _
      $region10: #{ds_attention.1} parent=5 // pred_check_branch
        %205 = sbr.rel (%p202) target = $region12
      $region11: #{ds_attention.1} parent=5 // pred_region
        %s206 = ssub.s32 %s12, 1
        // Predicated region
        $region13: #{ds_attention.1} parent=11 // pred_check
          %p207 = pneg %p164
        $region14: #{ds_attention.1} parent=11 // pred_check_branch
          %209 = sbr.rel (%p207) target = $region16
        $region15: #{ds_attention.1} parent=11 // pred_region
          %s211 = ssub.s32 16, 16
          %212 = vsyncadd [#allocation6], %s211
          %s214 = sshll.u32 %s4, 4
          %s215 = int_to_ptr.vmem [resolvable:$true] %s214
          %217 = dma.vmem_to_smem %s215, 16, [#allocation5], [#allocation6]
        $region16: #{ds_attention.1} parent=11 // pred_fallthru
          _
      $region12: #{ds_attention.1} parent=5 // pred_fallthru
        _
      %p218 = scmp.lt.s32.totalorder %s12, 2
      // Predicated region
      $region17: #{ds_attention.1} parent=5 // pred_check
        %p219 = pneg %p218
      $region18: #{ds_attention.1} parent=5 // pred_check_branch
        %221 = sbr.rel (%p219) target = $region20
      $region19: #{ds_attention.1} parent=5 // pred_region
        // Predicated region
        $region21: #{ds_attention.1} parent=19 // pred_check
          %p222 = pneg %p53
        $region22: #{ds_attention.1} parent=19 // pred_check_branch
          %224 = sbr.rel (%p222) target = $region24
        $region23: #{ds_attention.1} parent=19 // pred_region
          %p225 = scmp.lt.s32.totalorder %s19, 1
          %s226 = scalar_select %p225, %s19, 1
          %p227 = scmp.lt.s32.totalorder %s20, 0
          %s228 = scalar_select %p227, %s20, 0
          %s229 = sadd.s32 %s228, %s226
          %s230 = smul.addr %s229, 8
          %s231 = scalar_lea.vmem %s0, %s230
        $region24: #{ds_attention.1} parent=19 // pred_fallthru
          _
        // Predicated region
        $region25: #{ds_attention.1} parent=19 // pred_check
          %p232 = pneg %p81
        $region26: #{ds_attention.1} parent=19 // pred_check_branch
          %234 = sbr.rel (%p232) target = $region28
        $region27: #{ds_attention.1} parent=19 // pred_region
          %p235 = scmp.lt.s32.totalorder %s19, 1
          %s236 = scalar_select %p235, %s19, 1
          %p237 = scmp.lt.s32.totalorder %s21, 0
          %s238 = scalar_select %p237, %s21, 0
          %s239 = sadd.s32 %s238, %s236
          %s240 = smul.addr %s239, 8
          %s241 = scalar_lea.vmem %s1, %s240
        $region28: #{ds_attention.1} parent=19 // pred_fallthru
          _
        // Predicated region
        $region29: #{ds_attention.1} parent=19 // pred_check
          %p242 = pneg %p109
        $region30: #{ds_attention.1} parent=19 // pred_check_branch
          %244 = sbr.rel (%p242) target = $region32
        $region31: #{ds_attention.1} parent=19 // pred_region
          %p245 = scmp.lt.s32.totalorder %s19, 1
          %s246 = scalar_select %p245, %s19, 1
          %p247 = scmp.lt.s32.totalorder %s21, 0
          %s248 = scalar_select %p247, %s21, 0
          %s249 = sadd.s32 %s248, %s246
          %s250 = smul.addr %s249, 8
          %s251 = scalar_lea.vmem %s2, %s250
        $region32: #{ds_attention.1} parent=19 // pred_fallthru
          _
        // Predicated region
        $region33: #{ds_attention.1} parent=19 // pred_check
          %p252 = pneg %p137
        $region34: #{ds_attention.1} parent=19 // pred_check_branch
          %254 = sbr.rel (%p252) target = $region36
        $region35: #{ds_attention.1} parent=19 // pred_region
          %p255 = scmp.lt.s32.totalorder %s19, 1
          %s256 = scalar_select %p255, %s19, 1
          %p257 = scmp.lt.s32.totalorder %s21, 0
          %s258 = scalar_select %p257, %s21, 0
          %s259 = sadd.s32 %s258, %s256
          %s260 = scalar_lea.vmem %s3, %s259
        $region36: #{ds_attention.1} parent=19 // pred_fallthru
          _
      $region20: #{ds_attention.1} parent=5 // pred_fallthru
        _
      %p261 = scmp.le.s32.totalorder 1, %s12
      %p262 = scmp.lt.s32.totalorder %s12, 3
      %p263 = pnand %p261, %p262
      %p264 = pneg %p263
      // Predicated region
      $region37: #{ds_attention.1} parent=5 // pred_check
        _
      $region38: #{ds_attention.1} parent=5 // pred_check_branch
        %266 = sbr.rel (%p263) target = $region40
      $region39: #{ds_attention.1} parent=5 // pred_region
        %s267 = ssub.s32 %s12, 1
        // Predicated region
        $region41: #{ds_attention.1} parent=39 // pred_check
          %p268 = pneg %p164
        $region42: #{ds_attention.1} parent=39 // pred_check_branch
          %270 = sbr.rel (%p268) target = $region44
        $region43: #{ds_attention.1} parent=39 // pred_region
          %271 = dma.done [#allocation6], 16
        $region44: #{ds_attention.1} parent=39 // pred_fallthru
          _
        %272 = sfence
        %p273 = scmp.lt.s32.totalorder %s22, 1
        %s274 = scalar_select %p273, %s22, 1
        %p275 = scmp.lt.s32.totalorder %s23, 0
        %s276 = scalar_select %p275, %s23, 0
        %s277 = sadd.s32 %s276, %s274
        %s278 = smul.addr %s277, 8
        %s279 = scalar_lea.vmem %s0, %s278
        %p280 = pneg %p59
        %p281 = pneg %p56
        %p282 = scmp.lt.s32.totalorder %s22, 1
        %s283 = scalar_select %p282, %s22, 1
        %p284 = scmp.lt.s32.totalorder %s24, 0
        %s285 = scalar_select %p284, %s24, 0
        %s286 = sadd.s32 %s285, %s283
        %s287 = smul.addr %s286, 8
        %s288 = scalar_lea.vmem %s1, %s287
        %p289 = pneg %p87
        %p290 = pneg %p84
        %p291 = scmp.lt.s32.totalorder %s22, 1
        %s292 = scalar_select %p291, %s22, 1
        %p293 = scmp.lt.s32.totalorder %s24, 0
        %s294 = scalar_select %p293, %s24, 0
        %s295 = sadd.s32 %s294, %s292
        %s296 = smul.addr %s295, 8
        %s297 = scalar_lea.vmem %s2, %s296
        %p298 = pneg %p115
        %p299 = pneg %p112
        %p300 = scmp.lt.s32.totalorder %s22, 1
        %s301 = scalar_select %p300, %s22, 1
        %p302 = scmp.lt.s32.totalorder %s24, 0
        %s303 = scalar_select %p302, %s24, 0
        %s304 = sadd.s32 %s303, %s301
        %s305 = scalar_lea.vmem %s3, %s304
        %p306 = pneg %p143
        %p307 = pneg %p140
        %p308 = pneg %p164
        %p309 = pneg %p161
        %p310 = pneg %p192
        %p311 = pneg %p189
        %p312 = scmp.lt.s32.totalorder %s22, 1
        %s313 = scalar_select %p312, %s22, 1
        %p314 = scmp.lt.s32.totalorder %s23, 0
        %s315 = scalar_select %p314, %s23, 0
        %s316 = sadd.s32 %s315, %s313
        %s317 = smul.addr %s316, 8
        %s318 = scalar_lea.vmem %s5, %s317
        %p319 = scmp.lt.s32.totalorder %s22, 1
        %s320 = scalar_select %p319, %s22, 1
        %p321 = scmp.lt.s32.totalorder %s23, 0
        %s322 = scalar_select %p321, %s23, 0
        %s323 = sadd.s32 %s322, %s320
        %s324 = smul.addr %s323, 8
        %s325 = scalar_lea.vmem %s0, %s324
        %p326 = scmp.lt.s32.totalorder %s22, 1
        %s327 = scalar_select %p326, %s22, 1
        %p328 = scmp.lt.s32.totalorder %s24, 0
        %s329 = scalar_select %p328, %s24, 0
        %s330 = sadd.s32 %s329, %s327
        %s331 = smul.addr %s330, 8
        %s332 = scalar_lea.vmem %s1, %s331
        %p333 = scmp.lt.s32.totalorder %s22, 1
        %s334 = scalar_select %p333, %s22, 1
        %p335 = scmp.lt.s32.totalorder %s24, 0
        %s336 = scalar_select %p335, %s24, 0
        %s337 = sadd.s32 %s336, %s334
        %s338 = smul.addr %s337, 8
        %s339 = scalar_lea.vmem %s2, %s338
        %p340 = scmp.lt.s32.totalorder %s22, 1
        %s341 = scalar_select %p340, %s22, 1
        %p342 = scmp.lt.s32.totalorder %s24, 0
        %s343 = scalar_select %p342, %s24, 0
        %s344 = sadd.s32 %s343, %s341
        %s345 = scalar_lea.vmem %s3, %s344
        %p346 = scmp.lt.s32.totalorder %s22, 1
        %s347 = scalar_select %p346, %s22, 1
        %p348 = scmp.lt.s32.totalorder %s23, 0
        %s349 = scalar_select %p348, %s23, 0
        %s350 = sadd.s32 %s349, %s347
        %s351 = smul.addr %s350, 8
        %s352 = scalar_lea.vmem %s5, %s351
        %p353 = scmp.eq.s32.totalorder %s24, 0
        // Predicated region
        $region45: #{ds_attention.1} parent=39 // pred_check
          %p354 = pneg %p353
        $region46: #{ds_attention.1} parent=39 // pred_check_branch
          %356 = sbr.rel (%p354) target = $region48
        $region47: #{ds_attention.1} parent=39 // pred_region
          %vm357 = vcmask 7168
          %358 = vst.msk [vmem:[#allocation2] sm:$0xff] %vm357, -inf
          %359 = vst.msk [vmem:[#allocation2 + $0x8] sm:$0xff] %vm357, -inf
          %360 = vst.msk [vmem:[#allocation2 + $0x10] sm:$0xff] %vm357, -inf
          %361 = vst.msk [vmem:[#allocation2 + $0x18] sm:$0xff] %vm357, -inf
          %362 = vst.msk [vmem:[#allocation3] sm:$0xff] %vm357, 0.0
          %363 = vst.msk [vmem:[#allocation3 + $0x8] sm:$0xff] %vm357, 0.0
          %364 = vst.msk [vmem:[#allocation3 + $0x10] sm:$0xff] %vm357, 0.0
          %365 = vst.msk [vmem:[#allocation3 + $0x18] sm:$0xff] %vm357, 0.0
          %vm366 = vcmask 261120
          %367 = vst.msk [vmem:[#allocation4] sm:$0xff] %vm366, 0.0
          %368 = vst.msk [vmem:[#allocation4 + $0x8] sm:$0xff] %vm366, 0.0
          %369 = vst.msk [vmem:[#allocation4 + $0x10] sm:$0xff] %vm366, 0.0
          %370 = vst.msk [vmem:[#allocation4 + $0x18] sm:$0xff] %vm366, 0.0
        $region48: #{ds_attention.1} parent=39 // pred_fallthru
          _
        %s371 = smul.u32 %s24, 8
        %s372 = smul.u32 %s23, 8
        %s373 = sadd.s32 %s372, 7
        %p374 = scmp.le.s32.totalorder %s371, %s373
        // Predicated region
        $region49: #{ds_attention.1} parent=39 // pred_check
          %p375 = pneg %p374
        $region50: #{ds_attention.1} parent=39 // pred_check_branch
          %377 = sbr.rel (%p375) target = $region52
        $region51: #{ds_attention.1} parent=39 // pred_region
          %s378 = sld [smem:[#allocation5 + %s22]]
          %v379 = vld [vmem:[%s345] sm:$0x1]
          %v380 = vlaneseq
          %v381 = vshrl.u32 %v380, 7
          %v382 = vstv %s372
          %v383 = vadd.s32 %v382, %v381
          %v384 = vlaneseq
          %v385 = vand.u32 %v384, 127
          %v386 = vstv %s371
          %v387 = vadd.s32 %v386, %v385
          %vm388 = vcmp.le.s32.totalorder %v387, %v383
          %v389 = vld [vmem:[%s325] sm:$0xff]
          %v390 = vld [vmem:[%s332] sm:$0xff]
          %v391 = vld [vmem:[%s339] sm:$0xff]
          %vm392 = vcmask 261120
          %v394 = vsel %vm392, %v389, 0
          %v397 = vsel %vm392, %v390, 0
          %399 = vmatprep.subr.mxu0 0.0
          %400 = vmatpush1.xpose.msra.mxu0 %v397
          %401 = vmatprep.subr.mxu0 0.0
          %402 = vmatpush1.xpose.msra.mxu0 0.0
          %403 = vmatprep.subr.mxu0 0.0
          %404 = vmatpush1.xpose.msra.mxu0 0.0
          %405 = vmatprep.subr.mxu0 0.0
          %406 = vmatpush1.xpose.msra.mxu0 0.0
          %407 = vmatprep.subr.mxu0 0.0
          %408 = vmatpush1.xpose.msra.mxu0 0.0
          %409 = vmatprep.subr.mxu0 0.0
          %410 = vmatpush1.xpose.msra.mxu0 0.0
          %411 = vmatprep.subr.mxu0 0.0
          %412 = vmatpush1.xpose.msra.mxu0 0.0
          %413 = vmatprep.subr.mxu0 0.0
          %414 = vmatpush1.xpose.msra.mxu0 0.0
          %415 = vmatprep.subr.mxu0 0.0
          %416 = vmatpush1.xpose.msra.mxu0 0.0
          %417 = vmatprep.subr.mxu0 0.0
          %418 = vmatpush1.xpose.msra.mxu0 0.0
          %419 = vmatprep.subr.mxu0 0.0
          %420 = vmatpush1.xpose.msra.mxu0 0.0
          %421 = vmatprep.subr.mxu0 0.0
          %422 = vmatpush1.xpose.msra.mxu0 0.0
          %423 = vmatprep.subr.mxu0 0.0
          %424 = vmatpush1.xpose.msra.mxu0 0.0
          %425 = vmatprep.subr.mxu0 0.0
          %426 = vmatpush1.xpose.msra.mxu0 0.0
          %427 = vmatprep.subr.mxu0 0.0
          %428 = vmatpush1.xpose.msra.mxu0 0.0
          %429 = vmatprep.subr.mxu0 0.0
          %430 = vmatpush1.xpose.msra.mxu0 0.0
          %431 = vmatprep.subr.mxu0 0.0
          %432 = vmatpush1.xpose.msra.mxu0 0.0
          %433 = vmatprep.subr.mxu0 0.0
          %434 = vmatpush1.xpose.msra.mxu0 0.0
          %435 = vmatprep.subr.mxu0 0.0
          %436 = vmatpush1.xpose.msra.mxu0 0.0
          %437 = vmatprep.subr.mxu0 0.0
          %438 = vmatpush1.xpose.msra.mxu0 0.0
          %439 = vmatprep.subr.mxu0 0.0
          %440 = vmatpush1.xpose.msra.mxu0 0.0
          %441 = vmatprep.subr.mxu0 0.0
          %442 = vmatpush1.xpose.msra.mxu0 0.0
          %443 = vmatprep.subr.mxu0 0.0
          %444 = vmatpush1.xpose.msra.mxu0 0.0
          %445 = vmatprep.subr.mxu0 0.0
          %446 = vmatpush1.xpose.msra.mxu0 0.0
          %447 = vmatprep.subr.mxu0 0.0
          %448 = vmatpush1.xpose.msra.mxu0 0.0
          %449 = vmatprep.subr.mxu0 0.0
          %450 = vmatpush1.xpose.msra.mxu0 0.0
          %451 = vmatprep.subr.mxu0 0.0
          %452 = vmatpush1.xpose.msra.mxu0 0.0
          %453 = vmatprep.subr.mxu0 0.0
          %454 = vmatpush1.xpose.msra.mxu0 0.0
          %455 = vmatprep.subr.mxu0 0.0
          %456 = vmatpush1.xpose.msra.mxu0 0.0
          %457 = vmatprep.subr.mxu0 0.0
          %458 = vmatpush1.xpose.msra.mxu0 0.0
          %459 = vmatprep.subr.mxu0 0.0
          %460 = vmatpush1.xpose.msra.mxu0 0.0
          %461 = vmatprep.subr.mxu0 0.0
          %462 = vmatpush1.xpose.msra.mxu0 0.0
          %463 = vmatprep.mubr.f32.mxu0 0.0
          %464 = vmatmul.mubr.f32.gmra.mrb[0].mxu0 %v394
          %v465 = vpop.f32.mrb[0].mxu0
          %v466 = vadd.f32 0.0, %v465
          %v467 = vpop.f32.mrb[0].mxu0
          %468 = vdwg.mxu0
          %v469 = vstv %s378
          %v470 = vmul.f32 %v466, %v469
          %v472 = vlaneseq
          %v473 = vshrl.u32 %v472, 7
          %v474 = vsub.s32 0, %v473
          %v475 = vrot.slane %v379, %v474
          %v477 = vadd.f32 %v470, %v475
          %v478 = vsel %vm388, %v477, -1e+30
          %v479 = vld [vmem:[#allocation2] sm:$0xff]
          %vm480 = vcmask 64512
          %v481 = vsel %vm480, %v478, -inf
          %482 = vmax.xlane.f32.xlu0 %v481
          %v483 = vpop.xlane.xlu0 %482
          %v484 = vmax.f32 %v479, %v483
          %v485 = vsub.f32 %v479, %v484
          %v486 = vmul.f32 %v485, 1.442695
          %v487 = vpow.pop %v486
          %489 = vset.pattern.permute.xlu0 0
          %490 = vperm.xlu0 %489, %v484
          %v491 = vpop.permute.xlu0 %490
          %v493 = vsub.f32 %v478, %v491
          %v494 = vmul.f32 %v493, 1.442695
          %v495 = vpow.pop %v494
          %v496 = vld [vmem:[#allocation3] sm:$0xff]
          %v497 = vmul.f32 %v487, %v496
          %v498 = vsel %vm480, %v495, 0.0
          %499 = vadd.xlane.f32.xlu0 %v498
          %v500 = vpop.xlane.xlu0 %499
          %v501 = vadd.f32 %v497, %v500
          %vm502 = vcmask 7168
          %503 = vst.msk [vmem:[#allocation3] sm:$0xff] %vm502, %v501
          %v504 = vld [vmem:[#allocation4] sm:$0xff]
          %506 = vset.pattern.permute.xlu0 0
          %507 = vperm.xlu0 %506, %v487
          %v508 = vpop.permute.xlu0 %507
          %v510 = vmul.f32 %v508, %v504
          %v512 = vsel %vm480, %v495, 0
          %514 = vmatprep.subr.mxu0 0.0
          %515 = vmatpush1.msra.mxu0 %v391
          %516 = vmatprep.subr.mxu0 0.0
          %517 = vmatpush1.msra.mxu0 0.0
          %518 = vmatprep.subr.mxu0 0.0
          %519 = vmatpush1.msra.mxu0 0.0
          %520 = vmatprep.subr.mxu0 0.0
          %521 = vmatpush1.msra.mxu0 0.0
          %522 = vmatprep.subr.mxu0 0.0
          %523 = vmatpush1.msra.mxu0 0.0
          %524 = vmatprep.subr.mxu0 0.0
          %525 = vmatpush1.msra.mxu0 0.0
          %526 = vmatprep.subr.mxu0 0.0
          %527 = vmatpush1.msra.mxu0 0.0
          %528 = vmatprep.subr.mxu0 0.0
          %529 = vmatpush1.msra.mxu0 0.0
          %530 = vmatprep.subr.mxu0 0.0
          %531 = vmatpush1.msra.mxu0 0.0
          %532 = vmatprep.subr.mxu0 0.0
          %533 = vmatpush1.msra.mxu0 0.0
          %534 = vmatprep.subr.mxu0 0.0
          %535 = vmatpush1.msra.mxu0 0.0
          %536 = vmatprep.subr.mxu0 0.0
          %537 = vmatpush1.msra.mxu0 0.0
          %538 = vmatprep.subr.mxu0 0.0
          %539 = vmatpush1.msra.mxu0 0.0
          %540 = vmatprep.subr.mxu0 0.0
          %541 = vmatpush1.msra.mxu0 0.0
          %542 = vmatprep.subr.mxu0 0.0
          %543 = vmatpush1.msra.mxu0 0.0
          %544 = vmatprep.subr.mxu0 0.0
          %545 = vmatpush1.msra.mxu0 0.0
          %546 = vmatprep.subr.mxu0 0.0
          %547 = vmatpush1.msra.mxu0 0.0
          %548 = vmatprep.subr.mxu0 0.0
          %549 = vmatpush1.msra.mxu0 0.0
          %550 = vmatprep.subr.mxu0 0.0
          %551 = vmatpush1.msra.mxu0 0.0
          %552 = vmatprep.subr.mxu0 0.0
          %553 = vmatpush1.msra.mxu0 0.0
          %554 = vmatprep.subr.mxu0 0.0
          %555 = vmatpush1.msra.mxu0 0.0
          %556 = vmatprep.subr.mxu0 0.0
          %557 = vmatpush1.msra.mxu0 0.0
          %558 = vmatprep.subr.mxu0 0.0
          %559 = vmatpush1.msra.mxu0 0.0
          %560 = vmatprep.subr.mxu0 0.0
          %561 = vmatpush1.msra.mxu0 0.0
          %562 = vmatprep.subr.mxu0 0.0
          %563 = vmatpush1.msra.mxu0 0.0
          %564 = vmatprep.subr.mxu0 0.0
          %565 = vmatpush1.msra.mxu0 0.0
          %566 = vmatprep.subr.mxu0 0.0
          %567 = vmatpush1.msra.mxu0 0.0
          %568 = vmatprep.subr.mxu0 0.0
          %569 = vmatpush1.msra.mxu0 0.0
          %570 = vmatprep.subr.mxu0 0.0
          %571 = vmatpush1.msra.mxu0 0.0
          %572 = vmatprep.subr.mxu0 0.0
          %573 = vmatpush1.msra.mxu0 0.0
          %574 = vmatprep.subr.mxu0 0.0
          %575 = vmatpush1.msra.mxu0 0.0
          %576 = vmatprep.subr.mxu0 0.0
          %577 = vmatpush1.msra.mxu0 0.0
          %578 = vmatprep.mubr.f32.mxu0 0.0
          %579 = vmatmul.mubr.f32.gmra.mrb[0].mxu0 %v512
          %v580 = vpop.f32.mrb[0].mxu0
          %v581 = vadd.f32 0.0, %v580
          %v582 = vpop.f32.mrb[0].mxu0
          %583 = vdwg.mxu0
          %v584 = vadd.f32 %v510, %v581
          %585 = vst.msk [vmem:[#allocation4] sm:$0xff] %vm392, %v584
          %586 = vst.msk [vmem:[#allocation2] sm:$0xff] %vm502, %v484
          %v587 = vld [vmem:[%s325] sm:$0xff]
          %v588 = vld [vmem:[%s332] sm:$0xff]
          %v589 = vld [vmem:[%s339] sm:$0xff]
          %591 = vrot.lane.b32.xlu0 %v587, 96
          %v592 = vpop.permute.xlu0 %591
          %594 = vrot.lane.b32.xlu0 %v588, 96
          %v595 = vpop.permute.xlu0 %594
          %v596 = vsel %vm392, %v592, 0
          %v598 = vsel %vm392, %v595, 0
          %600 = vmatprep.subr.mxu0 0.0
          %601 = vmatpush1.xpose.msra.mxu0 %v598
          %602 = vmatprep.subr.mxu0 0.0
          %603 = vmatpush1.xpose.msra.mxu0 0.0
          %604 = vmatprep.subr.mxu0 0.0
          %605 = vmatpush1.xpose.msra.mxu0 0.0
          %606 = vmatprep.subr.mxu0 0.0
          %607 = vmatpush1.xpose.msra.mxu0 0.0
          %608 = vmatprep.subr.mxu0 0.0
          %609 = vmatpush1.xpose.msra.mxu0 0.0
          %610 = vmatprep.subr.mxu0 0.0
          %611 = vmatpush1.xpose.msra.mxu0 0.0
          %612 = vmatprep.subr.mxu0 0.0
          %613 = vmatpush1.xpose.msra.mxu0 0.0
          %614 = vmatprep.subr.mxu0 0.0
          %615 = vmatpush1.xpose.msra.mxu0 0.0
          %616 = vmatprep.subr.mxu0 0.0
          %617 = vmatpush1.xpose.msra.mxu0 0.0
          %618 = vmatprep.subr.mxu0 0.0
          %619 = vmatpush1.xpose.msra.mxu0 0.0
          %620 = vmatprep.subr.mxu0 0.0
          %621 = vmatpush1.xpose.msra.mxu0 0.0
          %622 = vmatprep.subr.mxu0 0.0
          %623 = vmatpush1.xpose.msra.mxu0 0.0
          %624 = vmatprep.subr.mxu0 0.0
          %625 = vmatpush1.xpose.msra.mxu0 0.0
          %626 = vmatprep.subr.mxu0 0.0
          %627 = vmatpush1.xpose.msra.mxu0 0.0
          %628 = vmatprep.subr.mxu0 0.0
          %629 = vmatpush1.xpose.msra.mxu0 0.0
          %630 = vmatprep.subr.mxu0 0.0
          %631 = vmatpush1.xpose.msra.mxu0 0.0
          %632 = vmatprep.subr.mxu0 0.0
          %633 = vmatpush1.xpose.msra.mxu0 0.0
          %634 = vmatprep.subr.mxu0 0.0
          %635 = vmatpush1.xpose.msra.mxu0 0.0
          %636 = vmatprep.subr.mxu0 0.0
          %637 = vmatpush1.xpose.msra.mxu0 0.0
          %638 = vmatprep.subr.mxu0 0.0
          %639 = vmatpush1.xpose.msra.mxu0 0.0
          %640 = vmatprep.subr.mxu0 0.0
          %641 = vmatpush1.xpose.msra.mxu0 0.0
          %642 = vmatprep.subr.mxu0 0.0
          %643 = vmatpush1.xpose.msra.mxu0 0.0
          %644 = vmatprep.subr.mxu0 0.0
          %645 = vmatpush1.xpose.msra.mxu0 0.0
          %646 = vmatprep.subr.mxu0 0.0
          %647 = vmatpush1.xpose.msra.mxu0 0.0
          %648 = vmatprep.subr.mxu0 0.0
          %649 = vmatpush1.xpose.msra.mxu0 0.0
          %650 = vmatprep.subr.mxu0 0.0
          %651 = vmatpush1.xpose.msra.mxu0 0.0
          %652 = vmatprep.subr.mxu0 0.0
          %653 = vmatpush1.xpose.msra.mxu0 0.0
          %654 = vmatprep.subr.mxu0 0.0
          %655 = vmatpush1.xpose.msra.mxu0 0.0
          %656 = vmatprep.subr.mxu0 0.0
          %657 = vmatpush1.xpose.msra.mxu0 0.0
          %658 = vmatprep.subr.mxu0 0.0
          %659 = vmatpush1.xpose.msra.mxu0 0.0
          %660 = vmatprep.subr.mxu0 0.0
          %661 = vmatpush1.xpose.msra.mxu0 0.0
          %662 = vmatprep.subr.mxu0 0.0
          %663 = vmatpush1.xpose.msra.mxu0 0.0
          %664 = vmatprep.mubr.f32.mxu0 0.0
          %665 = vmatmul.mubr.f32.gmra.mrb[0].mxu0 %v596
          %v666 = vpop.f32.mrb[0].mxu0
          %v667 = vadd.f32 0.0, %v666
          %v668 = vpop.f32.mrb[0].mxu0
          %669 = vdwg.mxu0
          %v670 = vmul.f32 %v667, %v469
          %v671 = vadd.f32 %v670, %v475
          %v672 = vsel %vm388, %v671, -1e+30
          %s673 = scalar_lea.vmem [#allocation2], 8
          %v674 = vld [vmem:[%s673] sm:$0xff]
          %v675 = vsel %vm480, %v672, -inf
          %676 = vmax.xlane.f32.xlu0 %v675
          %v677 = vpop.xlane.xlu0 %676
          %v678 = vmax.f32 %v674, %v677
          %v679 = vsub.f32 %v674, %v678
          %v680 = vmul.f32 %v679, 1.442695
          %v681 = vpow.pop %v680
          %683 = vset.pattern.permute.xlu0 0
          %684 = vperm.xlu0 %683, %v678
          %v685 = vpop.permute.xlu0 %684
          %v687 = vsub.f32 %v672, %v685
          %v688 = vmul.f32 %v687, 1.442695
          %v689 = vpow.pop %v688
          %s690 = scalar_lea.vmem [#allocation3], 8
          %v691 = vld [vmem:[%s690] sm:$0xff]
          %v692 = vmul.f32 %v681, %v691
          %v693 = vsel %vm480, %v689, 0.0
          %694 = vadd.xlane.f32.xlu0 %v693
          %v695 = vpop.xlane.xlu0 %694
          %v696 = vadd.f32 %v692, %v695
          %697 = vst.msk [vmem:[%s690] sm:$0xff] %vm502, %v696
          %s698 = scalar_lea.vmem [#allocation4], 8
          %v699 = vld [vmem:[%s698] sm:$0xff]
          %701 = vset.pattern.permute.xlu0 0
          %702 = vperm.xlu0 %701, %v681
          %v703 = vpop.permute.xlu0 %702
          %v705 = vmul.f32 %v703, %v699
          %707 = vrot.lane.b32.xlu0 %v589, 96
          %v708 = vpop.permute.xlu0 %707
          %v711 = vsel %vm480, %v689, 0
          %713 = vmatprep.subr.mxu0 0.0
          %714 = vmatpush1.msra.mxu0 %v708
          %715 = vmatprep.subr.mxu0 0.0
          %716 = vmatpush1.msra.mxu0 0.0
          %717 = vmatprep.subr.mxu0 0.0
          %718 = vmatpush1.msra.mxu0 0.0
          %719 = vmatprep.subr.mxu0 0.0
          %720 = vmatpush1.msra.mxu0 0.0
          %721 = vmatprep.subr.mxu0 0.0
          %722 = vmatpush1.msra.mxu0 0.0
          %723 = vmatprep.subr.mxu0 0.0
          %724 = vmatpush1.msra.mxu0 0.0
          %725 = vmatprep.subr.mxu0 0.0
          %726 = vmatpush1.msra.mxu0 0.0
          %727 = vmatprep.subr.mxu0 0.0
          %728 = vmatpush1.msra.mxu0 0.0
          %729 = vmatprep.subr.mxu0 0.0
          %730 = vmatpush1.msra.mxu0 0.0
          %731 = vmatprep.subr.mxu0 0.0
          %732 = vmatpush1.msra.mxu0 0.0
          %733 = vmatprep.subr.mxu0 0.0
          %734 = vmatpush1.msra.mxu0 0.0
          %735 = vmatprep.subr.mxu0 0.0
          %736 = vmatpush1.msra.mxu0 0.0
          %737 = vmatprep.subr.mxu0 0.0
          %738 = vmatpush1.msra.mxu0 0.0
          %739 = vmatprep.subr.mxu0 0.0
          %740 = vmatpush1.msra.mxu0 0.0
          %741 = vmatprep.subr.mxu0 0.0
          %742 = vmatpush1.msra.mxu0 0.0
          %743 = vmatprep.subr.mxu0 0.0
          %744 = vmatpush1.msra.mxu0 0.0
          %745 = vmatprep.subr.mxu0 0.0
          %746 = vmatpush1.msra.mxu0 0.0
          %747 = vmatprep.subr.mxu0 0.0
          %748 = vmatpush1.msra.mxu0 0.0
          %749 = vmatprep.subr.mxu0 0.0
          %750 = vmatpush1.msra.mxu0 0.0
          %751 = vmatprep.subr.mxu0 0.0
          %752 = vmatpush1.msra.mxu0 0.0
          %753 = vmatprep.subr.mxu0 0.0
          %754 = vmatpush1.msra.mxu0 0.0
          %755 = vmatprep.subr.mxu0 0.0
          %756 = vmatpush1.msra.mxu0 0.0
          %757 = vmatprep.subr.mxu0 0.0
          %758 = vmatpush1.msra.mxu0 0.0
          %759 = vmatprep.subr.mxu0 0.0
          %760 = vmatpush1.msra.mxu0 0.0
          %761 = vmatprep.subr.mxu0 0.0
          %762 = vmatpush1.msra.mxu0 0.0
          %763 = vmatprep.subr.mxu0 0.0
          %764 = vmatpush1.msra.mxu0 0.0
          %765 = vmatprep.subr.mxu0 0.0
          %766 = vmatpush1.msra.mxu0 0.0
          %767 = vmatprep.subr.mxu0 0.0
          %768 = vmatpush1.msra.mxu0 0.0
          %769 = vmatprep.subr.mxu0 0.0
          %770 = vmatpush1.msra.mxu0 0.0
          %771 = vmatprep.subr.mxu0 0.0
          %772 = vmatpush1.msra.mxu0 0.0
          %773 = vmatprep.subr.mxu0 0.0
          %774 = vmatpush1.msra.mxu0 0.0
          %775 = vmatprep.subr.mxu0 0.0
          %776 = vmatpush1.msra.mxu0 0.0
          %777 = vmatprep.mubr.f32.mxu0 0.0
          %778 = vmatmul.mubr.f32.gmra.mrb[0].mxu0 %v711
          %v779 = vpop.f32.mrb[0].mxu0
          %v780 = vadd.f32 0.0, %v779
          %v781 = vpop.f32.mrb[0].mxu0
          %782 = vdwg.mxu0
          %v783 = vadd.f32 %v705, %v780
          %784 = vst.msk [vmem:[%s698] sm:$0xff] %vm392, %v783
          %785 = vst.msk [vmem:[%s673] sm:$0xff] %vm502, %v678
          %v786 = vld [vmem:[%s325] sm:$0xff]
          %v787 = vld [vmem:[%s332] sm:$0xff]
          %v788 = vld [vmem:[%s339] sm:$0xff]
          %790 = vrot.lane.b32.xlu0 %v786, 64
          %v791 = vpop.permute.xlu0 %790
          %793 = vrot.lane.b32.xlu0 %v787, 64
          %v794 = vpop.permute.xlu0 %793
          %v795 = vsel %vm392, %v791, 0
          %v797 = vsel %vm392, %v794, 0
          %799 = vmatprep.subr.mxu0 0.0
          %800 = vmatpush1.xpose.msra.mxu0 %v797
          %801 = vmatprep.subr.mxu0 0.0
          %802 = vmatpush1.xpose.msra.mxu0 0.0
          %803 = vmatprep.subr.mxu0 0.0
          %804 = vmatpush1.xpose.msra.mxu0 0.0
          %805 = vmatprep.subr.mxu0 0.0
          %806 = vmatpush1.xpose.msra.mxu0 0.0
          %807 = vmatprep.subr.mxu0 0.0
          %808 = vmatpush1.xpose.msra.mxu0 0.0
          %809 = vmatprep.subr.mxu0 0.0
          %810 = vmatpush1.xpose.msra.mxu0 0.0
          %811 = vmatprep.subr.mxu0 0.0
          %812 = vmatpush1.xpose.msra.mxu0 0.0
          %813 = vmatprep.subr.mxu0 0.0
          %814 = vmatpush1.xpose.msra.mxu0 0.0
          %815 = vmatprep.subr.mxu0 0.0
          %816 = vmatpush1.xpose.msra.mxu0 0.0
          %817 = vmatprep.subr.mxu0 0.0
          %818 = vmatpush1.xpose.msra.mxu0 0.0
          %819 = vmatprep.subr.mxu0 0.0
          %820 = vmatpush1.xpose.msra.mxu0 0.0
          %821 = vmatprep.subr.mxu0 0.0
          %822 = vmatpush1.xpose.msra.mxu0 0.0
          %823 = vmatprep.subr.mxu0 0.0
          %824 = vmatpush1.xpose.msra.mxu0 0.0
          %825 = vmatprep.subr.mxu0 0.0
          %826 = vmatpush1.xpose.msra.mxu0 0.0
          %827 = vmatprep.subr.mxu0 0.0
          %828 = vmatpush1.xpose.msra.mxu0 0.0
          %829 = vmatprep.subr.mxu0 0.0
          %830 = vmatpush1.xpose.msra.mxu0 0.0
          %831 = vmatprep.subr.mxu0 0.0
          %832 = vmatpush1.xpose.msra.mxu0 0.0
          %833 = vmatprep.subr.mxu0 0.0
          %834 = vmatpush1.xpose.msra.mxu0 0.0
          %835 = vmatprep.subr.mxu0 0.0
          %836 = vmatpush1.xpose.msra.mxu0 0.0
          %837 = vmatprep.subr.mxu0 0.0
          %838 = vmatpush1.xpose.msra.mxu0 0.0
          %839 = vmatprep.subr.mxu0 0.0
          %840 = vmatpush1.xpose.msra.mxu0 0.0
          %841 = vmatprep.subr.mxu0 0.0
          %842 = vmatpush1.xpose.msra.mxu0 0.0
          %843 = vmatprep.subr.mxu0 0.0
          %844 = vmatpush1.xpose.msra.mxu0 0.0
          %845 = vmatprep.subr.mxu0 0.0
          %846 = vmatpush1.xpose.msra.mxu0 0.0
          %847 = vmatprep.subr.mxu0 0.0
          %848 = vmatpush1.xpose.msra.mxu0 0.0
          %849 = vmatprep.subr.mxu0 0.0
          %850 = vmatpush1.xpose.msra.mxu0 0.0
          %851 = vmatprep.subr.mxu0 0.0
          %852 = vmatpush1.xpose.msra.mxu0 0.0
          %853 = vmatprep.subr.mxu0 0.0
          %854 = vmatpush1.xpose.msra.mxu0 0.0
          %855 = vmatprep.subr.mxu0 0.0
          %856 = vmatpush1.xpose.msra.mxu0 0.0
          %857 = vmatprep.subr.mxu0 0.0
          %858 = vmatpush1.xpose.msra.mxu0 0.0
          %859 = vmatprep.subr.mxu0 0.0
          %860 = vmatpush1.xpose.msra.mxu0 0.0
          %861 = vmatprep.subr.mxu0 0.0
          %862 = vmatpush1.xpose.msra.mxu0 0.0
          %863 = vmatprep.mubr.f32.mxu0 0.0
          %864 = vmatmul.mubr.f32.gmra.mrb[0].mxu0 %v795
          %v865 = vpop.f32.mrb[0].mxu0
          %v866 = vadd.f32 0.0, %v865
          %v867 = vpop.f32.mrb[0].mxu0
          %868 = vdwg.mxu0
          %v869 = vmul.f32 %v866, %v469
          %v870 = vadd.f32 %v869, %v475
          %v871 = vsel %vm388, %v870, -1e+30
          %s872 = scalar_lea.vmem [#allocation2], 16
          %v873 = vld [vmem:[%s872] sm:$0xff]
          %v874 = vsel %vm480, %v871, -inf
          %875 = vmax.xlane.f32.xlu0 %v874
          %v876 = vpop.xlane.xlu0 %875
          %v877 = vmax.f32 %v873, %v876
          %v878 = vsub.f32 %v873, %v877
          %v879 = vmul.f32 %v878, 1.442695
          %v880 = vpow.pop %v879
          %882 = vset.pattern.permute.xlu0 0
          %883 = vperm.xlu0 %882, %v877
          %v884 = vpop.permute.xlu0 %883
          %v886 = vsub.f32 %v871, %v884
          %v887 = vmul.f32 %v886, 1.442695
          %v888 = vpow.pop %v887
          %s889 = scalar_lea.vmem [#allocation3], 16
          %v890 = vld [vmem:[%s889] sm:$0xff]
          %v891 = vmul.f32 %v880, %v890
          %v892 = vsel %vm480, %v888, 0.0
          %893 = vadd.xlane.f32.xlu0 %v892
          %v894 = vpop.xlane.xlu0 %893
          %v895 = vadd.f32 %v891, %v894
          %896 = vst.msk [vmem:[%s889] sm:$0xff] %vm502, %v895
          %s897 = scalar_lea.vmem [#allocation4], 16
          %v898 = vld [vmem:[%s897] sm:$0xff]
          %900 = vset.pattern.permute.xlu0 0
          %901 = vperm.xlu0 %900, %v880
          %v902 = vpop.permute.xlu0 %901
          %v904 = vmul.f32 %v902, %v898
          %906 = vrot.lane.b32.xlu0 %v788, 64
          %v907 = vpop.permute.xlu0 %906
          %v910 = vsel %vm480, %v888, 0
          %912 = vmatprep.subr.mxu0 0.0
          %913 = vmatpush1.msra.mxu0 %v907
          %914 = vmatprep.subr.mxu0 0.0
          %915 = vmatpush1.msra.mxu0 0.0
          %916 = vmatprep.subr.mxu0 0.0
          %917 = vmatpush1.msra.mxu0 0.0
          %918 = vmatprep.subr.mxu0 0.0
          %919 = vmatpush1.msra.mxu0 0.0
          %920 = vmatprep.subr.mxu0 0.0
          %921 = vmatpush1.msra.mxu0 0.0
          %922 = vmatprep.subr.mxu0 0.0
          %923 = vmatpush1.msra.mxu0 0.0
          %924 = vmatprep.subr.mxu0 0.0
          %925 = vmatpush1.msra.mxu0 0.0
          %926 = vmatprep.subr.mxu0 0.0
          %927 = vmatpush1.msra.mxu0 0.0
          %928 = vmatprep.subr.mxu0 0.0
          %929 = vmatpush1.msra.mxu0 0.0
          %930 = vmatprep.subr.mxu0 0.0
          %931 = vmatpush1.msra.mxu0 0.0
          %932 = vmatprep.subr.mxu0 0.0
          %933 = vmatpush1.msra.mxu0 0.0
          %934 = vmatprep.subr.mxu0 0.0
          %935 = vmatpush1.msra.mxu0 0.0
          %936 = vmatprep.subr.mxu0 0.0
          %937 = vmatpush1.msra.mxu0 0.0
          %938 = vmatprep.subr.mxu0 0.0
          %939 = vmatpush1.msra.mxu0 0.0
          %940 = vmatprep.subr.mxu0 0.0
          %941 = vmatpush1.msra.mxu0 0.0
          %942 = vmatprep.subr.mxu0 0.0
          %943 = vmatpush1.msra.mxu0 0.0
          %944 = vmatprep.subr.mxu0 0.0
          %945 = vmatpush1.msra.mxu0 0.0
          %946 = vmatprep.subr.mxu0 0.0
          %947 = vmatpush1.msra.mxu0 0.0
          %948 = vmatprep.subr.mxu0 0.0
          %949 = vmatpush1.msra.mxu0 0.0
          %950 = vmatprep.subr.mxu0 0.0
          %951 = vmatpush1.msra.mxu0 0.0
          %952 = vmatprep.subr.mxu0 0.0
          %953 = vmatpush1.msra.mxu0 0.0
          %954 = vmatprep.subr.mxu0 0.0
          %955 = vmatpush1.msra.mxu0 0.0
          %956 = vmatprep.subr.mxu0 0.0
          %957 = vmatpush1.msra.mxu0 0.0
          %958 = vmatprep.subr.mxu0 0.0
          %959 = vmatpush1.msra.mxu0 0.0
          %960 = vmatprep.subr.mxu0 0.0
          %961 = vmatpush1.msra.mxu0 0.0
          %962 = vmatprep.subr.mxu0 0.0
          %963 = vmatpush1.msra.mxu0 0.0
          %964 = vmatprep.subr.mxu0 0.0
          %965 = vmatpush1.msra.mxu0 0.0
          %966 = vmatprep.subr.mxu0 0.0
          %967 = vmatpush1.msra.mxu0 0.0
          %968 = vmatprep.subr.mxu0 0.0
          %969 = vmatpush1.msra.mxu0 0.0
          %970 = vmatprep.subr.mxu0 0.0
          %971 = vmatpush1.msra.mxu0 0.0
          %972 = vmatprep.subr.mxu0 0.0
          %973 = vmatpush1.msra.mxu0 0.0
          %974 = vmatprep.subr.mxu0 0.0
          %975 = vmatpush1.msra.mxu0 0.0
          %976 = vmatprep.mubr.f32.mxu0 0.0
          %977 = vmatmul.mubr.f32.gmra.mrb[0].mxu0 %v910
          %v978 = vpop.f32.mrb[0].mxu0
          %v979 = vadd.f32 0.0, %v978
          %v980 = vpop.f32.mrb[0].mxu0
          %981 = vdwg.mxu0
          %v982 = vadd.f32 %v904, %v979
          %983 = vst.msk [vmem:[%s897] sm:$0xff] %vm392, %v982
          %984 = vst.msk [vmem:[%s872] sm:$0xff] %vm502, %v877
          %v985 = vld [vmem:[%s325] sm:$0xff]
          %v986 = vld [vmem:[%s332] sm:$0xff]
          %v987 = vld [vmem:[%s339] sm:$0xff]
          %989 = vrot.lane.b32.xlu0 %v985, 32
          %v990 = vpop.permute.xlu0 %989
          %992 = vrot.lane.b32.xlu0 %v986, 32
          %v993 = vpop.permute.xlu0 %992
          %v994 = vsel %vm392, %v990, 0
          %v996 = vsel %vm392, %v993, 0
          %998 = vmatprep.subr.mxu0 0.0
          %999 = vmatpush1.xpose.msra.mxu0 %v996
          %1000 = vmatprep.subr.mxu0 0.0
          %1001 = vmatpush1.xpose.msra.mxu0 0.0
          %1002 = vmatprep.subr.mxu0 0.0
          %1003 = vmatpush1.xpose.msra.mxu0 0.0
          %1004 = vmatprep.subr.mxu0 0.0
          %1005 = vmatpush1.xpose.msra.mxu0 0.0
          %1006 = vmatprep.subr.mxu0 0.0
          %1007 = vmatpush1.xpose.msra.mxu0 0.0
          %1008 = vmatprep.subr.mxu0 0.0
          %1009 = vmatpush1.xpose.msra.mxu0 0.0
          %1010 = vmatprep.subr.mxu0 0.0
          %1011 = vmatpush1.xpose.msra.mxu0 0.0
          %1012 = vmatprep.subr.mxu0 0.0
          %1013 = vmatpush1.xpose.msra.mxu0 0.0
          %1014 = vmatprep.subr.mxu0 0.0
          %1015 = vmatpush1.xpose.msra.mxu0 0.0
          %1016 = vmatprep.subr.mxu0 0.0
          %1017 = vmatpush1.xpose.msra.mxu0 0.0
          %1018 = vmatprep.subr.mxu0 0.0
          %1019 = vmatpush1.xpose.msra.mxu0 0.0
          %1020 = vmatprep.subr.mxu0 0.0
          %1021 = vmatpush1.xpose.msra.mxu0 0.0
          %1022 = vmatprep.subr.mxu0 0.0
          %1023 = vmatpush1.xpose.msra.mxu0 0.0
          %1024 = vmatprep.subr.mxu0 0.0
          %1025 = vmatpush1.xpose.msra.mxu0 0.0
          %1026 = vmatprep.subr.mxu0 0.0
          %1027 = vmatpush1.xpose.msra.mxu0 0.0
          %1028 = vmatprep.subr.mxu0 0.0
          %1029 = vmatpush1.xpose.msra.mxu0 0.0
          %1030 = vmatprep.subr.mxu0 0.0
          %1031 = vmatpush1.xpose.msra.mxu0 0.0
          %1032 = vmatprep.subr.mxu0 0.0
          %1033 = vmatpush1.xpose.msra.mxu0 0.0
          %1034 = vmatprep.subr.mxu0 0.0
          %1035 = vmatpush1.xpose.msra.mxu0 0.0
          %1036 = vmatprep.subr.mxu0 0.0
          %1037 = vmatpush1.xpose.msra.mxu0 0.0
          %1038 = vmatprep.subr.mxu0 0.0
          %1039 = vmatpush1.xpose.msra.mxu0 0.0
          %1040 = vmatprep.subr.mxu0 0.0
          %1041 = vmatpush1.xpose.msra.mxu0 0.0
          %1042 = vmatprep.subr.mxu0 0.0
          %1043 = vmatpush1.xpose.msra.mxu0 0.0
          %1044 = vmatprep.subr.mxu0 0.0
          %1045 = vmatpush1.xpose.msra.mxu0 0.0
          %1046 = vmatprep.subr.mxu0 0.0
          %1047 = vmatpush1.xpose.msra.mxu0 0.0
          %1048 = vmatprep.subr.mxu0 0.0
          %1049 = vmatpush1.xpose.msra.mxu0 0.0
          %1050 = vmatprep.subr.mxu0 0.0
          %1051 = vmatpush1.xpose.msra.mxu0 0.0
          %1052 = vmatprep.subr.mxu0 0.0
          %1053 = vmatpush1.xpose.msra.mxu0 0.0
          %1054 = vmatprep.subr.mxu0 0.0
          %1055 = vmatpush1.xpose.msra.mxu0 0.0
          %1056 = vmatprep.subr.mxu0 0.0
          %1057 = vmatpush1.xpose.msra.mxu0 0.0
          %1058 = vmatprep.subr.mxu0 0.0
          %1059 = vmatpush1.xpose.msra.mxu0 0.0
          %1060 = vmatprep.subr.mxu0 0.0
          %1061 = vmatpush1.xpose.msra.mxu0 0.0
          %1062 = vmatprep.mubr.f32.mxu0 0.0
          %1063 = vmatmul.mubr.f32.gmra.mrb[0].mxu0 %v994
          %v1064 = vpop.f32.mrb[0].mxu0
          %v1065 = vadd.f32 0.0, %v1064
          %v1066 = vpop.f32.mrb[0].mxu0
          %1067 = vdwg.mxu0
          %v1068 = vmul.f32 %v1065, %v469
          %v1069 = vadd.f32 %v1068, %v475
          %v1070 = vsel %vm388, %v1069, -1e+30
          %s1071 = scalar_lea.vmem [#allocation2], 24
          %v1072 = vld [vmem:[%s1071] sm:$0xff]
          %v1073 = vsel %vm480, %v1070, -inf
          %1074 = vmax.xlane.f32.xlu0 %v1073
          %v1075 = vpop.xlane.xlu0 %1074
          %v1076 = vmax.f32 %v1072, %v1075
          %v1077 = vsub.f32 %v1072, %v1076
          %v1078 = vmul.f32 %v1077, 1.442695
          %v1079 = vpow.pop %v1078
          %1081 = vset.pattern.permute.xlu0 0
          %1082 = vperm.xlu0 %1081, %v1076
          %v1083 = vpop.permute.xlu0 %1082
          %v1085 = vsub.f32 %v1070, %v1083
          %v1086 = vmul.f32 %v1085, 1.442695
          %v1087 = vpow.pop %v1086
          %s1088 = scalar_lea.vmem [#allocation3], 24
          %v1089 = vld [vmem:[%s1088] sm:$0xff]
          %v1090 = vmul.f32 %v1079, %v1089
          %v1091 = vsel %vm480, %v1087, 0.0
          %1092 = vadd.xlane.f32.xlu0 %v1091
          %v1093 = vpop.xlane.xlu0 %1092
          %v1094 = vadd.f32 %v1090, %v1093
          %1095 = vst.msk [vmem:[%s1088] sm:$0xff] %vm502, %v1094
          %s1096 = scalar_lea.vmem [#allocation4], 24
          %v1097 = vld [vmem:[%s1096] sm:$0xff]
          %1099 = vset.pattern.permute.xlu0 0
          %1100 = vperm.xlu0 %1099, %v1079
          %v1101 = vpop.permute.xlu0 %1100
          %v1103 = vmul.f32 %v1101, %v1097
          %1105 = vrot.lane.b32.xlu0 %v987, 32
          %v1106 = vpop.permute.xlu0 %1105
          %v1109 = vsel %vm480, %v1087, 0
          %1111 = vmatprep.subr.mxu0 0.0
          %1112 = vmatpush1.msra.mxu0 %v1106
          %1113 = vmatprep.subr.mxu0 0.0
          %1114 = vmatpush1.msra.mxu0 0.0
          %1115 = vmatprep.subr.mxu0 0.0
          %1116 = vmatpush1.msra.mxu0 0.0
          %1117 = vmatprep.subr.mxu0 0.0
          %1118 = vmatpush1.msra.mxu0 0.0
          %1119 = vmatprep.subr.mxu0 0.0
          %1120 = vmatpush1.msra.mxu0 0.0
          %1121 = vmatprep.subr.mxu0 0.0
          %1122 = vmatpush1.msra.mxu0 0.0
          %1123 = vmatprep.subr.mxu0 0.0
          %1124 = vmatpush1.msra.mxu0 0.0
          %1125 = vmatprep.subr.mxu0 0.0
          %1126 = vmatpush1.msra.mxu0 0.0
          %1127 = vmatprep.subr.mxu0 0.0
          %1128 = vmatpush1.msra.mxu0 0.0
          %1129 = vmatprep.subr.mxu0 0.0
          %1130 = vmatpush1.msra.mxu0 0.0
          %1131 = vmatprep.subr.mxu0 0.0
          %1132 = vmatpush1.msra.mxu0 0.0
          %1133 = vmatprep.subr.mxu0 0.0
          %1134 = vmatpush1.msra.mxu0 0.0
          %1135 = vmatprep.subr.mxu0 0.0
          %1136 = vmatpush1.msra.mxu0 0.0
          %1137 = vmatprep.subr.mxu0 0.0
          %1138 = vmatpush1.msra.mxu0 0.0
          %1139 = vmatprep.subr.mxu0 0.0
          %1140 = vmatpush1.msra.mxu0 0.0
          %1141 = vmatprep.subr.mxu0 0.0
          %1142 = vmatpush1.msra.mxu0 0.0
          %1143 = vmatprep.subr.mxu0 0.0
          %1144 = vmatpush1.msra.mxu0 0.0
          %1145 = vmatprep.subr.mxu0 0.0
          %1146 = vmatpush1.msra.mxu0 0.0
          %1147 = vmatprep.subr.mxu0 0.0
          %1148 = vmatpush1.msra.mxu0 0.0
          %1149 = vmatprep.subr.mxu0 0.0
          %1150 = vmatpush1.msra.mxu0 0.0
          %1151 = vmatprep.subr.mxu0 0.0
          %1152 = vmatpush1.msra.mxu0 0.0
          %1153 = vmatprep.subr.mxu0 0.0
          %1154 = vmatpush1.msra.mxu0 0.0
          %1155 = vmatprep.subr.mxu0 0.0
          %1156 = vmatpush1.msra.mxu0 0.0
          %1157 = vmatprep.subr.mxu0 0.0
          %1158 = vmatpush1.msra.mxu0 0.0
          %1159 = vmatprep.subr.mxu0 0.0
          %1160 = vmatpush1.msra.mxu0 0.0
          %1161 = vmatprep.subr.mxu0 0.0
          %1162 = vmatpush1.msra.mxu0 0.0
          %1163 = vmatprep.subr.mxu0 0.0
          %1164 = vmatpush1.msra.mxu0 0.0
          %1165 = vmatprep.subr.mxu0 0.0
          %1166 = vmatpush1.msra.mxu0 0.0
          %1167 = vmatprep.subr.mxu0 0.0
          %1168 = vmatpush1.msra.mxu0 0.0
          %1169 = vmatprep.subr.mxu0 0.0
          %1170 = vmatpush1.msra.mxu0 0.0
          %1171 = vmatprep.subr.mxu0 0.0
          %1172 = vmatpush1.msra.mxu0 0.0
          %1173 = vmatprep.subr.mxu0 0.0
          %1174 = vmatpush1.msra.mxu0 0.0
          %1175 = vmatprep.mubr.f32.mxu0 0.0
          %1176 = vmatmul.mubr.f32.gmra.mrb[0].mxu0 %v1109
          %v1177 = vpop.f32.mrb[0].mxu0
          %v1178 = vadd.f32 0.0, %v1177
          %v1179 = vpop.f32.mrb[0].mxu0
          %1180 = vdwg.mxu0
          %v1181 = vadd.f32 %v1103, %v1178
          %1182 = vst.msk [vmem:[%s1096] sm:$0xff] %vm392, %v1181
          %1183 = vst.msk [vmem:[%s1071] sm:$0xff] %vm502, %v1076
        $region52: #{ds_attention.1} parent=39 // pred_fallthru
          _
        // Predicated region
        $region53: #{ds_attention.1} parent=39 // pred_check
          %p1184 = pneg %p353
        $region54: #{ds_attention.1} parent=39 // pred_check_branch
          %1186 = sbr.rel (%p1184) target = $region56
        $region55: #{ds_attention.1} parent=39 // pred_region
          %v1187 = vld [vmem:[#allocation3] sm:$0xff]
          %v1188 = vrcp.pop %v1187
          %v1189 = vld [vmem:[#allocation4] sm:$0xff]
          %1191 = vset.pattern.permute.xlu0 0
          %1192 = vperm.xlu0 %1191, %v1188
          %v1193 = vpop.permute.xlu0 %1192
          %v1195 = vmul.f32 %v1189, %v1193
          %s1196 = scalar_lea.vmem [#allocation3], 8
          %v1197 = vld [vmem:[%s1196] sm:$0xff]
          %v1198 = vrcp.pop %v1197
          %s1199 = scalar_lea.vmem [#allocation4], 8
          %v1200 = vld [vmem:[%s1199] sm:$0xff]
          %1202 = vset.pattern.permute.xlu0 0
          %1203 = vperm.xlu0 %1202, %v1198
          %v1204 = vpop.permute.xlu0 %1203
          %v1206 = vmul.f32 %v1200, %v1204
          %s1207 = scalar_lea.vmem [#allocation3], 16
          %v1208 = vld [vmem:[%s1207] sm:$0xff]
          %v1209 = vrcp.pop %v1208
          %s1210 = scalar_lea.vmem [#allocation4], 16
          %v1211 = vld [vmem:[%s1210] sm:$0xff]
          %1213 = vset.pattern.permute.xlu0 0
          %1214 = vperm.xlu0 %1213, %v1209
          %v1215 = vpop.permute.xlu0 %1214
          %v1217 = vmul.f32 %v1211, %v1215
          %s1218 = scalar_lea.vmem [#allocation3], 24
          %v1219 = vld [vmem:[%s1218] sm:$0xff]
          %v1220 = vrcp.pop %v1219
          %s1221 = scalar_lea.vmem [#allocation4], 24
          %v1222 = vld [vmem:[%s1221] sm:$0xff]
          %1224 = vset.pattern.permute.xlu0 0
          %1225 = vperm.xlu0 %1224, %v1220
          %v1226 = vpop.permute.xlu0 %1225
          %v1228 = vmul.f32 %v1222, %v1226
          %1230 = vrot.lane.b32.xlu0 %v1206, 32
          %v1231 = vpop.permute.xlu0 %1230
          %1234 = vrot.lane.b32.xlu0 %v1217, 64
          %v1235 = vpop.permute.xlu0 %1234
          %1238 = vrot.lane.b32.xlu0 %v1228, 96
          %v1239 = vpop.permute.xlu0 %1238
          %vm1241 = vcmask 261120
          %v1242 = vsel %vm1241, %v1195, %v1231
          %vm1243 = vcmask 523264
          %v1244 = vsel %vm1243, %v1242, %v1235
          %vm1245 = vcmask 785408
          %v1246 = vsel %vm1245, %v1244, %v1239
          %1247 = vst [vmem:[%s352] sm:$0xff] %v1246
        $region56: #{ds_attention.1} parent=39 // pred_fallthru
          _
        %p1248 = scmp.lt.s32.totalorder %s22, 1
        %s1249 = scalar_select %p1248, %s22, 1
        %p1250 = scmp.lt.s32.totalorder %s23, 0
        %s1251 = scalar_select %p1250, %s23, 0
        %s1252 = sadd.s32 %s1251, %s1249
        %s1253 = smul.addr %s1252, 8
        %s1254 = scalar_lea.vmem %s5, %s1253
        // Predicated region
        $region57: #{ds_attention.1} parent=39 // pred_check
          %p1255 = pneg %p189
        $region58: #{ds_attention.1} parent=39 // pred_check_branch
          %1257 = sbr.rel (%p1255) target = $region60
        $region59: #{ds_attention.1} parent=39 // pred_region
          _
        $region60: #{ds_attention.1} parent=39 // pred_fallthru
          _
      $region40: #{ds_attention.1} parent=5 // pred_fallthru
        _
      %p1258 = scmp.le.s32.totalorder 2, %s12
      // Predicated region
      $region61: #{ds_attention.1} parent=5 // pred_check
        %p1259 = pneg %p1258
      $region62: #{ds_attention.1} parent=5 // pred_check_branch
        %1261 = sbr.rel (%p1259) target = $region64
      $region63: #{ds_attention.1} parent=5 // pred_region
        %s1262 = ssub.s32 %s12, 2
        // Predicated region
        $region65: #{ds_attention.1} parent=63 // pred_check
          %p1263 = pneg %p195
        $region66: #{ds_attention.1} parent=63 // pred_check_branch
          %1265 = sbr.rel (%p1263) target = $region68
        $region67: #{ds_attention.1} parent=63 // pred_region
          %p1266 = scmp.lt.s32.totalorder %s25, 1
          %s1267 = scalar_select %p1266, %s25, 1
          %p1268 = scmp.lt.s32.totalorder %s26, 0
          %s1269 = scalar_select %p1268, %s26, 0
          %s1270 = sadd.s32 %s1269, %s1267
          %s1271 = smul.addr %s1270, 8
          %s1272 = scalar_lea.vmem %s5, %s1271
        $region68: #{ds_attention.1} parent=63 // pred_fallthru
          _
      $region64: #{ds_attention.1} parent=5 // pred_fallthru
        _
    $region6: #{ds_attention.1} parent=1 // loop_footer
      %s16 = sadd.s32 1, %s12
    $region7: #{ds_attention.1} parent=1 // loop_footer_branch
      %11 = sbr.rel target = $region3
    $region8: #{ds_attention.1} parent=1 // loop_exit
      _
    %1273 = vsyncpa [#allocation6], 1
    %s1274 = scalar_lea.sflag [#allocation6], 1
    %1275 = vsyncpa %s1274, 1

</llo_original>
